<compile_context>
chip_gen: v7x
topology: tpu7x:2x2x1
jax: 0.10.0
libtpu: 0.0.40
codegen_flags: <defaults>
</compile_context>

<pallas_src>
import functools

import jax
import jax.numpy as jnp
from jax.experimental import pallas as pl
from jax.experimental.pallas import tpu as pltpu  # noqa: F401  (kept for CompilerParams when scaling)


def _round_up(n, m):
    return ((n + m - 1) // m) * m


# ----------------------------------------------------------------------------
# Pallas kernels (each runs once — no grid — and processes the whole batch)
# ----------------------------------------------------------------------------
def _attention_kernel(fst_ref, p_ref, pe_ref, zblk_ref, sct_ref,
                      a_log_up_ref, a_up_ref, hs_up_ref, e_ref, pos_ref, *,
                      r_actual):
    # fst  : (B, F, Rpad) bf16   L2-normalized features, NCHW-native layout, padded cols are 0
    # p    : (Mp, F)      bf16   [V_o_n @ W_o ; V_a_n @ W_a] zero-padded to Mp rows
    # pe   : (Mp, F)      f32    [V_o_n @ W_e_o ; V_a_n @ W_e_a] zero-padded
    # zblk : (K2p, Mp)    f32    block-diag [[Z_o, 0], [0, Z_a]] zero-padded
    # sct  : (2, Rpad)    f32    spatial code transposed, padded cols are 0
    fst = fst_ref[...]
    B = fst.shape[0]
    Mp, F = p_ref.shape

    # --- logits: A_log[b, m, r] = sum_f P[m, f] * Fs[b, r, f]  (bf16 MXU, f32 acc)
    p_b = jnp.broadcast_to(p_ref[...][None], (B, Mp, F))
    a_log = jnp.einsum('bmf,bfr->bmr', p_b, fst,
                       preferred_element_type=jnp.float32)          # (B, Mp, Rpad) f32

    # --- numerically stable softmax over the real R columns only (f32 VPU/EUP)
    col = jax.lax.broadcasted_iota(jnp.int32, a_log.shape, 2)
    a_msk = jnp.where(col < r_actual, a_log, -1e30)
    m = jnp.max(a_msk, axis=-1, keepdims=True)
    ex = jnp.exp(a_msk - m)
    denom = jnp.sum(ex, axis=-1, keepdims=True)
    a = ex * pl.reciprocal(denom, approx=False)                     # (B, Mp, Rpad) f32

    # --- Hs[b, m, f] = sum_r A[b, m, r] * Fs[b, r, f]   (bf16 MXU, f32 acc)
    hs = jnp.einsum('bmr,bfr->bmf', a.astype(jnp.bfloat16), fst,
                    preferred_element_type=jnp.float32)             # (B, Mp, F) f32

    # --- e[b, m] = sum_f Pe[m, f] * Hs[b, m, f]   (VPU mul + lane reduce)
    e_ref[...] = jnp.sum(pe_ref[...][None] * hs, axis=-1)           # (B, Mp)

    # --- Z projections folded in-kernel (block-diagonal over the fused o/a rows)
    zb = jnp.broadcast_to(zblk_ref[...][None], (B,) + zblk_ref.shape)  # (B, K2p, Mp)
    a_up = jnp.einsum('bkm,bmr->bkr', zb, a,
                      preferred_element_type=jnp.float32)           # (B, K2p, Rpad)
    a_up_ref[...] = a_up
    a_log_up_ref[...] = jnp.einsum('bkm,bmr->bkr', zb, a_log,
                                   preferred_element_type=jnp.float32)
    hs_up_ref[...] = jnp.einsum('bkm,bmf->bkf', zb, hs,
                                preferred_element_type=jnp.float32)  # (B, K2p, F)

    # --- positions[b, k, :] = sum_r A_up[b, k, r] * spatial_code[r, :]
    # (padded A_up columns are exactly 0, so Rpad columns are harmless)
    gx = sct_ref[0:1, :][None]                                       # (1, 1, Rpad)
    gy = sct_ref[1:2, :][None]
    pos_x = jnp.sum(a_up * gx, axis=-1, keepdims=True)               # (B, K2p, 1)
    pos_y = jnp.sum(a_up * gy, axis=-1, keepdims=True)
    pos_ref[...] = jnp.concatenate([pos_x, pos_y], axis=-1)          # (B, K2p, 2)


def _cross_kernel(gp_ref, sct_ref, fst_ref, masks_ref, hsx_ref):
    # gp  : (B, K2p, 5) f32 = [mx, my, 1/sx, 1/sy, 1/(2*3.14*sx*sy)] (a-path rows then o-path), zero-padded
    # sct : (2, Rpad)   f32 transposed spatial code (padded cols 0)
    # fst : (B, F, Rpad) bf16 normalized features (padded cols 0)
    gp = gp_ref[...]
    mx = gp[:, :, 0:1]
    my = gp[:, :, 1:2]
    isx = gp[:, :, 2:3]
    isy = gp[:, :, 3:4]
    icoef = gp[:, :, 4:5]
    gx = sct_ref[0:1, :][None]                                       # (1, 1, Rpad)
    gy = sct_ref[1:2, :][None]

    zx = (gx - mx) * isx                                             # (B, K2p, Rpad) f32
    zy = (gy - my) * isy
    masks = jnp.exp((zx * zx + zy * zy) * -0.5) * icoef
    masks_ref[...] = masks          # padded columns hold garbage; sliced off in wrapper

    # Hs_cross[b, k, f] = sum_r masks[b, k, r] * Fs[b, r, f]  (padded Fs cols are 0)
    hsx_ref[...] = jnp.einsum('bkr,bfr->bkf', masks.astype(jnp.bfloat16), fst_ref[...],
                              preferred_element_type=jnp.float32)


# ----------------------------------------------------------------------------
# pallas_call wrappers (single invocation each; whole arrays live in VMEM)
# ----------------------------------------------------------------------------
def attention_block(fst, P, Pe, Z_blk, sct, r_actual):
    B, F, Rpad = fst.shape
    Mp = P.shape[0]
    K2p = Z_blk.shape[0]
    kernel = functools.partial(_attention_kernel, r_actual=r_actual)
    return pl.pallas_call(
        kernel,
        out_shape=(
            jax.ShapeDtypeStruct((B, K2p, Rpad), jnp.float32),  # A_log_up
            jax.ShapeDtypeStruct((B, K2p, Rpad), jnp.float32),  # A_up
            jax.ShapeDtypeStruct((B, K2p, F), jnp.float32),     # Hs_up
            jax.ShapeDtypeStruct((B, Mp), jnp.float32),         # e (fused o/a rows)
            jax.ShapeDtypeStruct((B, K2p, 2), jnp.float32),     # positions
        ),
    )(fst, P, Pe, Z_blk, sct)


def cross_block(gparams, sct, fst):
    B, K2p, _ = gparams.shape
    F, Rpad = fst.shape[1], fst.shape[2]
    return pl.pallas_call(
        _cross_kernel,
        out_shape=(
            jax.ShapeDtypeStruct((B, K2p, Rpad), jnp.float32),  # Masks (a then o)
            jax.ShapeDtypeStruct((B, K2p, F), jnp.float32),     # Hs_cross (a then o)
        ),
    )(gparams, sct, fst)


# ----------------------------------------------------------------------------
# JAX glue (normalization, small projections, gaussian-parameter MLP)
# ----------------------------------------------------------------------------
def l2_normalize(x, axis=-1, eps=1e-12):
    # mirrors torch.nn.functional.normalize (p=2)
    n = jnp.sqrt(jnp.sum(x * x, axis=axis, keepdims=True))
    return x / jnp.maximum(n, eps)


def mlp(params, x):
    # TODO(synk): `NeuralNet` is defined outside CrossAttention.py; assumed to be
    #             Linear(D_in,300) -> ReLU -> Linear(300,4).
    w1, b1, w2, b2 = params
    h = jnp.maximum(jnp.dot(x, w1) + b1, 0.0)
    return jnp.dot(h, w2) + b2


def make_spatial_code(grid_size):
    xs = jnp.tile(jnp.arange(grid_size, dtype=jnp.float32)[None, :], (grid_size, 1))
    ys = jnp.tile(jnp.arange(grid_size, dtype=jnp.float32)[:, None], (1, grid_size))
    return jnp.stack([xs, ys], axis=-1).reshape(-1, 2)  # (R, 2), code = (col, row)


@functools.partial(jax.jit, static_argnames=("grid_size",))
def cross_attention_forward(x_nchw, params, grid_size):
    B, C, H, W = x_nchw.shape
    R = H * W
    Rpad = _round_up(R, 128)

    # NCHW-native feature slab (B, F=C, R): F.normalize(dim=-1) on the (B, R, F)
    # view == L2-normalize over C here.  Pad AFTER normalizing so padded columns
    # are exactly 0 (required invariant — see header).  bf16 halves the DMA bytes.
    Fs_t = x_nchw.reshape(B, C, R).astype(jnp.float32)
    Fs_t = l2_normalize(Fs_t, axis=1)
    Fs_t = jnp.pad(Fs_t, ((0, 0), (0, 0), (0, Rpad - R))).astype(jnp.bfloat16)

    V_a_n = l2_normalize(params["V_a"])      # (A, V)
    V_o_n = l2_normalize(params["V_o"])      # (O, V)
    num_o, num_a = V_o_n.shape[0], V_a_n.shape[0]
    M = num_o + num_a
    Mp = _round_up(M, 8)

    # Fold the tiny V @ W projections outside the kernel; fuse o/a paths along rows
    # and zero-pad rows to a sublane multiple.
    P_o = jnp.dot(V_o_n, params["W_o"])      # (O, F)
    P_a = jnp.dot(V_a_n, params["W_a"])      # (A, F)
    P = jnp.concatenate([P_o, P_a], axis=0)
    P = jnp.pad(P, ((0, Mp - M), (0, 0))).astype(jnp.bfloat16)       # (Mp, F) bf16

    Pe_o = jnp.dot(V_o_n, params["W_e_o"])   # (O, F)
    Pe_a = jnp.dot(V_a_n, params["W_e_a"])   # (A, F)
    Pe = jnp.concatenate([Pe_o, Pe_a], axis=0)
    Pe = jnp.pad(Pe, ((0, Mp - M), (0, 0)))                          # (Mp, F) f32

    Z_a, Z_o = params["Z_a"], params["Z_o"]  # (K, A), (K, O)
    K = Z_a.shape[0]
    K2 = 2 * K
    K2p = _round_up(K2, 8)
    Z_blk = jnp.zeros((K2p, Mp), jnp.float32)
    Z_blk = Z_blk.at[:K, :num_o].set(Z_o)
    Z_blk = Z_blk.at[K:K2, num_o:M].set(Z_a)

    sc = params["spatial_code"]                          # (R, 2)
    sct = jnp.pad(sc, ((0, Rpad - R), (0, 0))).T         # (2, Rpad)

    a_log_up, a_up, hs_up, e_all, pos_all = attention_block(Fs_t, P, Pe, Z_blk, sct, R)

    A_o_up = a_up[:, :K, :R]
    A_a_up = a_up[:, K:K2, :R]
    A_o_log_up = a_log_up[:, :K, :R]
    A_a_log_up = a_log_up[:, K:K2, :R]
    Hs_o_up = hs_up[:, :K]
    Hs_a_up = hs_up[:, K:K2]
    positions_o = pos_all[:, :K]
    positions_a = pos_all[:, K:K2]
    e_o = e_all[:, :num_o]
    e_a = e_all[:, num_o:M]

    s_a = jnp.dot(e_a, Z_a.T)                # (B, K)
    s_o = jnp.dot(e_o, Z_o.T)

    V_a_up = jnp.dot(Z_a, V_a_n)             # (K, V)
    V_o_up = jnp.dot(Z_o, V_o_n)

    def infer_gaussian(positions, Hs, V_up, net_params):
        v_rep = jnp.broadcast_to(V_up[None], (positions.shape[0],) + V_up.shape)
        inp = jnp.concatenate([Hs, positions, v_rep], axis=-1)
        gp = mlp(net_params, inp)                                    # (B, K, 4)
        delta_means = jnp.tanh(gp[..., :2]) * grid_size
        std = jax.nn.sigmoid(gp[..., 2:]) * grid_size
        return positions + delta_means, std

    # NOTE: the PyTorch source passes V_a_up to BOTH branches (object2actor and
    # actor2object); reproduced verbatim here.
    means_a, std_a = infer_gaussian(positions_o, Hs_o_up, V_a_up, params["net_o2a"])
    means_o, std_o = infer_gaussian(positions_a, Hs_a_up, V_a_up, params["net_a2o"])

    # Pre-process gaussian params for the kernel (multiply-only inner loop).
    # NOTE: no eps floor on std and 3.14 (not pi) — both match the PyTorch source.
    means = jnp.concatenate([means_a, means_o], axis=1)   # (B, 2K, 2)
    std = jnp.concatenate([std_a, std_o], axis=1)         # (B, 2K, 2)
    inv_std = 1.0 / std
    inv_coef = 1.0 / (2.0 * 3.14 * std[..., 0:1] * std[..., 1:2])
    gparams = jnp.concatenate([means, inv_std, inv_coef], axis=-1)   # (B, 2K, 5)
    gparams = jnp.pad(gparams, ((0, 0), (0, K2p - K2), (0, 0)))      # (B, K2p, 5)

    Masks_all, Hs_cross_all = cross_block(gparams, sct, Fs_t)
    Masks_a = Masks_all[:, :K, :R]
    Masks_o = Masks_all[:, K:K2, :R]
    Hs_a_cross = Hs_cross_all[:, :K]
    Hs_o_cross = Hs_cross_all[:, K:K2]

    Pe_a_up = jnp.dot(V_a_up, params["W_e_a"])   # (K, F)
    Pe_o_up = jnp.dot(V_o_up, params["W_e_o"])   # (K, F)
    s_a_cross = jnp.sum(Pe_a_up[None] * Hs_a_cross, axis=-1)   # (B, K)
    s_o_cross = jnp.sum(Pe_o_up[None] * Hs_o_cross, axis=-1)

    # label_type == 'interaction', lamb == -1 branch
    s = s_a + s_o + (s_a_cross * params["weight_cross_a"]
                     + s_o_cross * params["weight_cross_o"])
    s_self = s_a + s_o
    s_cross = s_a_cross + s_o_cross

    return {
        "s": s, "e_a": e_a, "e_o": e_o,
        "A_o": A_o_up, "A_a": A_a_up,
        "A_o_log": A_o_log_up, "A_a_log": A_a_log_up,
        "positions_o": positions_o, "positions_a": positions_a,
        "Masks_o": Masks_o, "Masks_a": Masks_a,
        "means_a": means_a, "std_variances_a": std_a,
        "means_o": means_o, "std_variances_o": std_o,
        "s_cross": s_cross, "s_self": s_self,
    }


# ----------------------------------------------------------------------------
# Deterministic parameter construction + demo
# ----------------------------------------------------------------------------
def make_params(key, dim_f, dim_v, num_a, num_o, num_k, grid_size):
    ks = jax.random.split(key, 14)
    d_in = dim_v + dim_f + 2
    d_hidden = 300

    def net_params(k):
        k1, k2 = jax.random.split(k)
        return (0.05 * jax.random.normal(k1, (d_in, d_hidden), jnp.float32),
                jnp.zeros((d_hidden,), jnp.float32),
                0.05 * jax.random.normal(k2, (d_hidden, 4), jnp.float32),
                jnp.zeros((4,), jnp.float32))

    return {
        # V parameters stored pre-normalized (as in __init__); forward
        # re-normalizes (idempotent).
        "V_a": l2_normalize(jax.random.normal(ks[0], (num_a, dim_v), jnp.float32)),
        "V_o": l2_normalize(jax.random.normal(ks[1], (num_o, dim_v), jnp.float32)),
        "W_a": jax.random.normal(ks[2], (dim_v, dim_f), jnp.float32),
        "W_o": jax.random.normal(ks[3], (dim_v, dim_f), jnp.float32),
        "W_e_a": jax.random.normal(ks[4], (dim_v, dim_f), jnp.float32),
        "W_e_o": jax.random.normal(ks[5], (dim_v, dim_f), jnp.float32),
        "Z_a": jax.random.uniform(ks[6], (num_k, num_a), jnp.float32),
        "Z_o": jax.random.uniform(ks[7], (num_k, num_o), jnp.float32),
        "weight_cross_a": jnp.zeros((1,), jnp.float32),
        "weight_cross_o": jnp.zeros((1,), jnp.float32),
        "net_o2a": net_params(ks[8]),
        "net_a2o": net_params(ks[9]),
        "spatial_code": make_spatial_code(grid_size),
    }


if __name__ == "__main__":
    B, dim_f, dim_v = 2, 32, 16
    num_a, num_o, num_k = 5, 6, 10
    grid_size = 7

    key = jax.random.PRNGKey(0)
    k_x, k_p = jax.random.split(key)
    x = jax.random.normal(k_x, (B, dim_f, grid_size, grid_size), jnp.float32)
    params = make_params(k_p, dim_f, dim_v, num_a, num_o, num_k, grid_size)

    out = cross_attention_forward(x, params, grid_size=grid_size)
    out = jax.block_until_ready(out)

    R = grid_size * grid_size
    # light sanity checks
    assert out["s"].shape == (B, num_k)
    assert out["A_o"].shape == (B, num_k, R)
    assert out["A_a"].shape == (B, num_k, R)
    assert out["Masks_a"].shape == (B, num_k, R)
    assert out["Masks_o"].shape == (B, num_k, R)
    assert out["positions_o"].shape == (B, num_k, 2)
    assert bool(jnp.all(jnp.isfinite(out["s"])))
    assert bool(jnp.all(jnp.isfinite(out["Masks_a"])))
    assert bool(jnp.all(jnp.isfinite(out["A_o_log"])))
    # softmax rows (projected through Z inside the kernel) must satisfy
    # sum_r A_o_up[b,k,r] == sum_o Z_o[k,o]
    row_sums = jnp.sum(out["A_o"], axis=-1)
    assert bool(jnp.allclose(row_sums, jnp.sum(params["Z_o"], axis=-1)[None, :],
                             rtol=1e-3, atol=1e-3))

    print("KERNEL_OK")
</pallas_src>

<mosaic_0001>
module attributes {stable_mosaic.version = 11 : i64} {
  func.func @_attention_kernel(%arg0: memref<2x32x128xbf16, #tpu.memory_space<vmem>>, %arg1: memref<16x32xbf16, #tpu.memory_space<vmem>>, %arg2: memref<16x32xf32, #tpu.memory_space<vmem>>, %arg3: memref<24x16xf32, #tpu.memory_space<vmem>>, %arg4: memref<2x128xf32, #tpu.memory_space<vmem>>, %arg5: memref<2x24x128xf32, #tpu.memory_space<vmem>>, %arg6: memref<2x24x128xf32, #tpu.memory_space<vmem>>, %arg7: memref<2x24x32xf32, #tpu.memory_space<vmem>>, %arg8: memref<2x16xf32, #tpu.memory_space<vmem>>, %arg9: memref<2x24x2xf32, #tpu.memory_space<vmem>>) attributes {dimension_semantics = [], scalar_prefetch = 0 : i64, scratch_operands = 0 : i64, tpu.core_type = #tpu.core_type<tc>} {
    %c0 = arith.constant 0 : index
    %c0_0 = arith.constant 0 : index
    %c0_1 = arith.constant 0 : index
    %0 = vector.load %arg0[%c0, %c0_0, %c0_1] : memref<2x32x128xbf16, #tpu.memory_space<vmem>>, vector<2x32x128xbf16>
    %c0_2 = arith.constant 0 : index
    %c0_3 = arith.constant 0 : index
    %1 = vector.load %arg1[%c0_2, %c0_3] : memref<16x32xbf16, #tpu.memory_space<vmem>>, vector<16x32xbf16>
    %2 = vector.shape_cast %1 : vector<16x32xbf16> to vector<1x16x32xbf16>
    %3 = vector.shape_cast %2 : vector<1x16x32xbf16> to vector<1x16x32xbf16>
    %4 = vector.broadcast %3 : vector<1x16x32xbf16> to vector<2x16x32xbf16>
    "tpu.trace_start"() <{level = 10 : i32, message = "bmf,bfr->bmr"}> : () -> ()
    %cst = arith.constant dense<0.000000e+00> : vector<2x16x128xf32>
    %5 = tpu.matmul %4, %0, %cst {dimension_numbers = #tpu.dot_dimension_numbers<[2], [1], [1], [2], [0, 0, 0, 1, 1, 2], [0], [0]>} : vector<2x16x32xbf16>, vector<2x32x128xbf16>, vector<2x16x128xf32> -> vector<2x16x128xf32>
    "tpu.trace_stop"() : () -> ()
    %6 = tpu.iota {dimensions = array<i32: 2>} : vector<2x16x128xi32>
    %c49_i32 = arith.constant 49 : i32
    %7 = vector.broadcast %c49_i32 : i32 to vector<2x16x128xi32>
    %8 = arith.cmpi slt, %6, %7 : vector<2x16x128xi32>
    %cst_4 = arith.constant -1.000000e+30 : f32
    %9 = vector.broadcast %cst_4 : f32 to vector<2x16x128xf32>
    %10 = arith.select %8, %5, %9 : vector<2x16x128xi1>, vector<2x16x128xf32>
    %cst_5 = arith.constant dense<0xFF800000> : vector<2x16xf32>
    %11 = vector.multi_reduction <maximumf>, %10, %cst_5 [2] : vector<2x16x128xf32> to vector<2x16xf32>
    %12 = vector.shape_cast %11 : vector<2x16xf32> to vector<2x16x1xf32>
    %13 = vector.broadcast %12 : vector<2x16x1xf32> to vector<2x16x128xf32>
    %14 = arith.subf %10, %13 : vector<2x16x128xf32>
    %15 = math.exp %14 : vector<2x16x128xf32>
    %cst_6 = arith.constant dense<0.000000e+00> : vector<2x16xf32>
    %16 = vector.multi_reduction <add>, %15, %cst_6 [2] : vector<2x16x128xf32> to vector<2x16xf32>
    %17 = vector.shape_cast %16 : vector<2x16xf32> to vector<2x16x1xf32>
    %18 = tpu.reciprocal %17 : vector<2x16x1xf32> -> vector<2x16x1xf32>
    %19 = vector.broadcast %18 : vector<2x16x1xf32> to vector<2x16x128xf32>
    %20 = arith.mulf %15, %19 : vector<2x16x128xf32>
    %21 = arith.truncf %20 : vector<2x16x128xf32> to vector<2x16x128xbf16>
    "tpu.trace_start"() <{level = 10 : i32, message = "bmr,bfr->bmf"}> : () -> ()
    %cst_7 = arith.constant dense<0.000000e+00> : vector<2x16x32xf32>
    %22 = tpu.matmul %21, %0, %cst_7 {dimension_numbers = #tpu.dot_dimension_numbers<[2], [2], [1], [1], [0, 0, 0, 1, 1, 1], [0], [0]>} : vector<2x16x128xbf16>, vector<2x32x128xbf16>, vector<2x16x32xf32> -> vector<2x16x32xf32>
    "tpu.trace_stop"() : () -> ()
    %c0_8 = arith.constant 0 : index
    %c0_9 = arith.constant 0 : index
    %23 = vector.load %arg2[%c0_8, %c0_9] : memref<16x32xf32, #tpu.memory_space<vmem>>, vector<16x32xf32>
    %24 = vector.shape_cast %23 : vector<16x32xf32> to vector<1x16x32xf32>
    %25 = vector.broadcast %24 : vector<1x16x32xf32> to vector<2x16x32xf32>
    %26 = arith.mulf %25, %22 : vector<2x16x32xf32>
    %cst_10 = arith.constant dense<0.000000e+00> : vector<2x16xf32>
    %27 = vector.multi_reduction <add>, %26, %cst_10 [2] : vector<2x16x32xf32> to vector<2x16xf32>
    %c0_11 = arith.constant 0 : index
    %c0_12 = arith.constant 0 : index
    %28 = vector.load %arg8[%c0_11, %c0_12] : memref<2x16xf32, #tpu.memory_space<vmem>>, vector<2x16xf32>
    tpu.vector_store %arg8[%c0_11, %c0_12], %27 {strides = array<i32>} : memref<2x16xf32, #tpu.memory_space<vmem>>, vector<2x16xf32>,
    %c0_13 = arith.constant 0 : index
    %c0_14 = arith.constant 0 : index
    %29 = vector.load %arg3[%c0_13, %c0_14] : memref<24x16xf32, #tpu.memory_space<vmem>>, vector<24x16xf32>
    %30 = vector.shape_cast %29 : vector<24x16xf32> to vector<1x24x16xf32>
    %31 = vector.shape_cast %30 : vector<1x24x16xf32> to vector<1x24x16xf32>
    %32 = vector.broadcast %31 : vector<1x24x16xf32> to vector<2x24x16xf32>
    "tpu.trace_start"() <{level = 10 : i32, message = "bkm,bmr->bkr"}> : () -> ()
    %cst_15 = arith.constant dense<0.000000e+00> : vector<2x24x128xf32>
    %33 = tpu.matmul %32, %20, %cst_15 {dimension_numbers = #tpu.dot_dimension_numbers<[2], [1], [1], [2], [0, 0, 0, 1, 1, 2], [0], [0]>} : vector<2x24x16xf32>, vector<2x16x128xf32>, vector<2x24x128xf32> -> vector<2x24x128xf32>
    "tpu.trace_stop"() : () -> ()
    %c0_16 = arith.constant 0 : index
    %c0_17 = arith.constant 0 : index
    %c0_18 = arith.constant 0 : index
    %34 = vector.load %arg6[%c0_16, %c0_17, %c0_18] : memref<2x24x128xf32, #tpu.memory_space<vmem>>, vector<2x24x128xf32>
    tpu.vector_store %arg6[%c0_16, %c0_17, %c0_18], %33 {strides = array<i32>} : memref<2x24x128xf32, #tpu.memory_space<vmem>>, vector<2x24x128xf32>,
    "tpu.trace_start"() <{level = 10 : i32, message = "bkm,bmr->bkr"}> : () -> ()
    %cst_19 = arith.constant dense<0.000000e+00> : vector<2x24x128xf32>
    %35 = tpu.matmul %32, %5, %cst_19 {dimension_numbers = #tpu.dot_dimension_numbers<[2], [1], [1], [2], [0, 0, 0, 1, 1, 2], [0], [0]>} : vector<2x24x16xf32>, vector<2x16x128xf32>, vector<2x24x128xf32> -> vector<2x24x128xf32>
    "tpu.trace_stop"() : () -> ()
    %c0_20 = arith.constant 0 : index
    %c0_21 = arith.constant 0 : index
    %c0_22 = arith.constant 0 : index
    %36 = vector.load %arg5[%c0_20, %c0_21, %c0_22] : memref<2x24x128xf32, #tpu.memory_space<vmem>>, vector<2x24x128xf32>
    tpu.vector_store %arg5[%c0_20, %c0_21, %c0_22], %35 {strides = array<i32>} : memref<2x24x128xf32, #tpu.memory_space<vmem>>, vector<2x24x128xf32>,
    "tpu.trace_start"() <{level = 10 : i32, message = "bkm,bmf->bkf"}> : () -> ()
    %cst_23 = arith.constant dense<0.000000e+00> : vector<2x24x32xf32>
    %37 = tpu.matmul %32, %22, %cst_23 {dimension_numbers = #tpu.dot_dimension_numbers<[2], [1], [1], [2], [0, 0, 0, 1, 1, 2], [0], [0]>} : vector<2x24x16xf32>, vector<2x16x32xf32>, vector<2x24x32xf32> -> vector<2x24x32xf32>
    "tpu.trace_stop"() : () -> ()
    %c0_24 = arith.constant 0 : index
    %c0_25 = arith.constant 0 : index
    %c0_26 = arith.constant 0 : index
    %38 = vector.load %arg7[%c0_24, %c0_25, %c0_26] : memref<2x24x32xf32, #tpu.memory_space<vmem>>, vector<2x24x32xf32>
    tpu.vector_store %arg7[%c0_24, %c0_25, %c0_26], %37 {strides = array<i32>} : memref<2x24x32xf32, #tpu.memory_space<vmem>>, vector<2x24x32xf32>,
    %c0_27 = arith.constant 0 : index
    %c0_28 = arith.constant 0 : index
    %39 = vector.load %arg4[%c0_27, %c0_28] : memref<2x128xf32, #tpu.memory_space<vmem>>, vector<1x128xf32>
    %40 = vector.shape_cast %39 : vector<1x128xf32> to vector<1x1x128xf32>
    %c1 = arith.constant 1 : index
    %c0_29 = arith.constant 0 : index
    %41 = vector.load %arg4[%c1, %c0_29] : memref<2x128xf32, #tpu.memory_space<vmem>>, vector<1x128xf32>
    %42 = vector.shape_cast %41 : vector<1x128xf32> to vector<1x1x128xf32>
    %43 = vector.broadcast %40 : vector<1x1x128xf32> to vector<2x24x128xf32>
    %44 = arith.mulf %33, %43 : vector<2x24x128xf32>
    %cst_30 = arith.constant dense<0.000000e+00> : vector<2x24xf32>
    %45 = vector.multi_reduction <add>, %44, %cst_30 [2] : vector<2x24x128xf32> to vector<2x24xf32>
    %46 = vector.shape_cast %45 : vector<2x24xf32> to vector<2x24x1xf32>
    %47 = vector.broadcast %42 : vector<1x1x128xf32> to vector<2x24x128xf32>
    %48 = arith.mulf %33, %47 : vector<2x24x128xf32>
    %cst_31 = arith.constant dense<0.000000e+00> : vector<2x24xf32>
    %49 = vector.multi_reduction <add>, %48, %cst_31 [2] : vector<2x24x128xf32> to vector<2x24xf32>
    %50 = vector.shape_cast %49 : vector<2x24xf32> to vector<2x24x1xf32>
    %51 = tpu.concatenate %46, %50 in 2 : vector<2x24x1xf32>, vector<2x24x1xf32> -> vector<2x24x2xf32>
    %c0_32 = arith.constant 0 : index
    %c0_33 = arith.constant 0 : index
    %c0_34 = arith.constant 0 : index
    %52 = vector.load %arg9[%c0_32, %c0_33, %c0_34] : memref<2x24x2xf32, #tpu.memory_space<vmem>>, vector<2x24x2xf32>
    tpu.vector_store %arg9[%c0_32, %c0_33, %c0_34], %51 {strides = array<i32>} : memref<2x24x2xf32, #tpu.memory_space<vmem>>, vector<2x24x2xf32>,
    return
  }
}

module attributes {stable_mosaic.version = 11 : i64} {
  func.func @_cross_kernel(%arg0: memref<2x24x5xf32, #tpu.memory_space<vmem>>, %arg1: memref<2x128xf32, #tpu.memory_space<vmem>>, %arg2: memref<2x32x128xbf16, #tpu.memory_space<vmem>>, %arg3: memref<2x24x128xf32, #tpu.memory_space<vmem>>, %arg4: memref<2x24x32xf32, #tpu.memory_space<vmem>>) attributes {dimension_semantics = [], scalar_prefetch = 0 : i64, scratch_operands = 0 : i64, tpu.core_type = #tpu.core_type<tc>} {
    %c0 = arith.constant 0 : index
    %c0_0 = arith.constant 0 : index
    %c0_1 = arith.constant 0 : index
    %0 = vector.load %arg0[%c0, %c0_0, %c0_1] : memref<2x24x5xf32, #tpu.memory_space<vmem>>, vector<2x24x5xf32>
    %1 = vector.extract_strided_slice %0 {offsets = [0, 0, 0], sizes = [2, 24, 1], strides = [1, 1, 1]} : vector<2x24x5xf32> to vector<2x24x1xf32>
    %2 = vector.extract_strided_slice %0 {offsets = [0, 0, 1], sizes = [2, 24, 1], strides = [1, 1, 1]} : vector<2x24x5xf32> to vector<2x24x1xf32>
    %3 = vector.extract_strided_slice %0 {offsets = [0, 0, 2], sizes = [2, 24, 1], strides = [1, 1, 1]} : vector<2x24x5xf32> to vector<2x24x1xf32>
    %4 = vector.extract_strided_slice %0 {offsets = [0, 0, 3], sizes = [2, 24, 1], strides = [1, 1, 1]} : vector<2x24x5xf32> to vector<2x24x1xf32>
    %5 = vector.extract_strided_slice %0 {offsets = [0, 0, 4], sizes = [2, 24, 1], strides = [1, 1, 1]} : vector<2x24x5xf32> to vector<2x24x1xf32>
    %c0_2 = arith.constant 0 : index
    %c0_3 = arith.constant 0 : index
    %6 = vector.load %arg1[%c0_2, %c0_3] : memref<2x128xf32, #tpu.memory_space<vmem>>, vector<1x128xf32>
    %7 = vector.shape_cast %6 : vector<1x128xf32> to vector<1x1x128xf32>
    %c1 = arith.constant 1 : index
    %c0_4 = arith.constant 0 : index
    %8 = vector.load %arg1[%c1, %c0_4] : memref<2x128xf32, #tpu.memory_space<vmem>>, vector<1x128xf32>
    %9 = vector.shape_cast %8 : vector<1x128xf32> to vector<1x1x128xf32>
    %10 = vector.broadcast %7 : vector<1x1x128xf32> to vector<2x24x128xf32>
    %11 = vector.broadcast %1 : vector<2x24x1xf32> to vector<2x24x128xf32>
    %12 = arith.subf %10, %11 : vector<2x24x128xf32>
    %13 = vector.broadcast %3 : vector<2x24x1xf32> to vector<2x24x128xf32>
    %14 = arith.mulf %12, %13 : vector<2x24x128xf32>
    %15 = vector.broadcast %9 : vector<1x1x128xf32> to vector<2x24x128xf32>
    %16 = vector.broadcast %2 : vector<2x24x1xf32> to vector<2x24x128xf32>
    %17 = arith.subf %15, %16 : vector<2x24x128xf32>
    %18 = vector.broadcast %4 : vector<2x24x1xf32> to vector<2x24x128xf32>
    %19 = arith.mulf %17, %18 : vector<2x24x128xf32>
    %20 = arith.mulf %14, %14 : vector<2x24x128xf32>
    %21 = arith.mulf %19, %19 : vector<2x24x128xf32>
    %22 = arith.addf %20, %21 : vector<2x24x128xf32>
    %cst = arith.constant -5.000000e-01 : f32
    %23 = vector.broadcast %cst : f32 to vector<2x24x128xf32>
    %24 = arith.mulf %22, %23 : vector<2x24x128xf32>
    %25 = math.exp %24 : vector<2x24x128xf32>
    %26 = vector.broadcast %5 : vector<2x24x1xf32> to vector<2x24x128xf32>
    %27 = arith.mulf %25, %26 : vector<2x24x128xf32>
    %c0_5 = arith.constant 0 : index
    %c0_6 = arith.constant 0 : index
    %c0_7 = arith.constant 0 : index
    %28 = vector.load %arg3[%c0_5, %c0_6, %c0_7] : memref<2x24x128xf32, #tpu.memory_space<vmem>>, vector<2x24x128xf32>
    tpu.vector_store %arg3[%c0_5, %c0_6, %c0_7], %27 {strides = array<i32>} : memref<2x24x128xf32, #tpu.memory_space<vmem>>, vector<2x24x128xf32>,
    %29 = arith.truncf %27 : vector<2x24x128xf32> to vector<2x24x128xbf16>
    %c0_8 = arith.constant 0 : index
    %c0_9 = arith.constant 0 : index
    %c0_10 = arith.constant 0 : index
    %30 = vector.load %arg2[%c0_8, %c0_9, %c0_10] : memref<2x32x128xbf16, #tpu.memory_space<vmem>>, vector<2x32x128xbf16>
    "tpu.trace_start"() <{level = 10 : i32, message = "bkr,bfr->bkf"}> : () -> ()
    %cst_11 = arith.constant dense<0.000000e+00> : vector<2x24x32xf32>
    %31 = tpu.matmul %29, %30, %cst_11 {dimension_numbers = #tpu.dot_dimension_numbers<[2], [2], [1], [1], [0, 0, 0, 1, 1, 1], [0], [0]>} : vector<2x24x128xbf16>, vector<2x32x128xbf16>, vector<2x24x32xf32> -> vector<2x24x32xf32>
    "tpu.trace_stop"() : () -> ()
    %c0_12 = arith.constant 0 : index
    %c0_13 = arith.constant 0 : index
    %c0_14 = arith.constant 0 : index
    %32 = vector.load %arg4[%c0_12, %c0_13, %c0_14] : memref<2x24x32xf32, #tpu.memory_space<vmem>>, vector<2x24x32xf32>
    tpu.vector_store %arg4[%c0_12, %c0_13, %c0_14], %31 {strides = array<i32>} : memref<2x24x32xf32, #tpu.memory_space<vmem>>, vector<2x24x32xf32>,
    return
  }
}

</mosaic_0001>

<llo_original>
// kernel: cross_attention_forward.2
$region0: #{cross_attention_forward.2}
  #allocation0 [shape = 'u32[]', space=smem, size = 0x4, offset = 0x4, fixed_abs, tag = 'smem constant byte address 0x4 - core index']
  #allocation1 [shape = 'u32[144,128]{1,0:T(1,128)}', space=vmem, size = 0x12000, scoped, tag = 'internal scratch']
  %s0 = inlined_call_operand.vmem [shape: bf16[2,32,128], index: 0, kind: input, shape index: {}]
  %s1 = inlined_call_operand.vmem [shape: bf16[16,32], index: 1, kind: input, shape index: {}]
  %s2 = inlined_call_operand.vmem [shape: f32[16,32], index: 2, kind: input, shape index: {}]
  %s3 = inlined_call_operand.vmem [shape: f32[24,16], index: 3, kind: input, shape index: {}]
  %s4 = inlined_call_operand.vmem [shape: f32[2,128], index: 4, kind: input, shape index: {}]
  %s5 = inlined_call_operand.vmem [shape: f32[2,24,128], index: 5, kind: output, shape index: {0}]
  %s6 = inlined_call_operand.vmem [shape: f32[2,24,128], index: 6, kind: output, shape index: {1}]
  %s7 = inlined_call_operand.vmem [shape: f32[2,24,32], index: 7, kind: output, shape index: {2}]
  %s8 = inlined_call_operand.vmem [shape: f32[2,16], index: 8, kind: output, shape index: {3}]
  %s9 = inlined_call_operand.vmem [shape: f32[2,24,2], index: 9, kind: output, shape index: {4}]
  %10 = xla_tuple %s5, %s6, %s7, %s8, %s9
  %s11 = sld [smem:[#allocation0]]
  $region62: #{cross_attention_forward.2} parent=0
    _
  %s13 = ssub.s32 1, %s11
  %s14 = scalar_select 0, %s13, %s11
  // Predicated region
  $region2: #{cross_attention_forward.2} parent=0 // pred_check
    _
  $region3: #{cross_attention_forward.2} parent=0 // pred_check_branch
    %16 = sbr.rel (0) target = $region5
  $region4: #{cross_attention_forward.2} parent=0 // pred_region
    _
  $region5: #{cross_attention_forward.2} parent=0 // pred_fallthru
    _
  // Predicated region
  $region6: #{cross_attention_forward.2} parent=0 // pred_check
    _
  $region7: #{cross_attention_forward.2} parent=0 // pred_check_branch
    %18 = sbr.rel (0) target = $region9
  $region8: #{cross_attention_forward.2} parent=0 // pred_region
    _
  $region9: #{cross_attention_forward.2} parent=0 // pred_fallthru
    _
  // Predicated region
  $region10: #{cross_attention_forward.2} parent=0 // pred_check
    _
  $region11: #{cross_attention_forward.2} parent=0 // pred_check_branch
    %20 = sbr.rel (0) target = $region13
  $region12: #{cross_attention_forward.2} parent=0 // pred_region
    _
  $region13: #{cross_attention_forward.2} parent=0 // pred_fallthru
    _
  // Predicated region
  $region14: #{cross_attention_forward.2} parent=0 // pred_check
    _
  $region15: #{cross_attention_forward.2} parent=0 // pred_check_branch
    %22 = sbr.rel (0) target = $region17
  $region16: #{cross_attention_forward.2} parent=0 // pred_region
    _
  $region17: #{cross_attention_forward.2} parent=0 // pred_fallthru
    _
  // Predicated region
  $region18: #{cross_attention_forward.2} parent=0 // pred_check
    _
  $region19: #{cross_attention_forward.2} parent=0 // pred_check_branch
    %24 = sbr.rel (0) target = $region21
  $region20: #{cross_attention_forward.2} parent=0 // pred_region
    _
  $region21: #{cross_attention_forward.2} parent=0 // pred_fallthru
    _
  %v26 = vld [vmem:[%s0] sm:$0xf]
  %v27 = vld [vmem:[%s0 + $0x4] sm:$0xf]
  %v28 = vld [vmem:[%s0 + $0x8] sm:$0xf]
  %v29 = vld [vmem:[%s0 + $0xc] sm:$0xf]
  %v30 = vld [vmem:[%s0 + $0x10] sm:$0xf]
  %v31 = vld [vmem:[%s0 + $0x14] sm:$0xf]
  %v32 = vld [vmem:[%s0 + $0x18] sm:$0xf]
  %v33 = vld [vmem:[%s0 + $0x1c] sm:$0xf]
  %v34 = vld [vmem:[%s1] sm:$0xf]
  %v35 = vld [vmem:[%s1 + $0x4] sm:$0xf]
  %v38 = vunpack.c.l.b16 %v34
  %v39 = vunpack.c.l.b16 %v35
  %v40 = vpack.c.b16 %v39, %v38
  %v45 = vunpack.c.l.b16 %v26
  %v46 = vunpack.c.l.b16 %v27
  %v47 = vunpack.c.l.b16 %v28
  %v48 = vunpack.c.l.b16 %v29
  %v49 = vpack.c.b16 %v46, %v45
  %v50 = vpack.c.b16 %v48, %v47
  %vm53 = vcmask 261120
  %v55 = vsel %vm53, %v40, 0
  %57 = vmatprep.subr.bf16.mxu0 0
  %58 = vmatpush1.bf16.msra.mxu0 %v49
  %59 = vmatprep.subr.bf16.mxu0 0
  %60 = vmatpush1.bf16.msra.mxu0 %v50
  %61 = vmatprep.subr.bf16.mxu0 0
  %62 = vmatpush1.bf16.msra.mxu0 0
  %63 = vmatprep.subr.bf16.mxu0 0
  %64 = vmatpush1.bf16.msra.mxu0 0
  %65 = vmatprep.subr.bf16.mxu0 0
  %66 = vmatpush1.bf16.msra.mxu0 0
  %67 = vmatprep.subr.bf16.mxu0 0
  %68 = vmatpush1.bf16.msra.mxu0 0
  %69 = vmatprep.subr.bf16.mxu0 0
  %70 = vmatpush1.bf16.msra.mxu0 0
  %71 = vmatprep.subr.bf16.mxu0 0
  %72 = vmatpush1.bf16.msra.mxu0 0
  %73 = vmatprep.subr.bf16.mxu0 0
  %74 = vmatpush1.bf16.msra.mxu0 0
  %75 = vmatprep.subr.bf16.mxu0 0
  %76 = vmatpush1.bf16.msra.mxu0 0
  %77 = vmatprep.subr.bf16.mxu0 0
  %78 = vmatpush1.bf16.msra.mxu0 0
  %79 = vmatprep.subr.bf16.mxu0 0
  %80 = vmatpush1.bf16.msra.mxu0 0
  %81 = vmatprep.subr.bf16.mxu0 0
  %82 = vmatpush1.bf16.msra.mxu0 0
  %83 = vmatprep.subr.bf16.mxu0 0
  %84 = vmatpush1.bf16.msra.mxu0 0
  %85 = vmatprep.subr.bf16.mxu0 0
  %86 = vmatpush1.bf16.msra.mxu0 0
  %87 = vmatprep.subr.bf16.mxu0 0
  %88 = vmatpush1.bf16.msra.mxu0 0
  %89 = vmatprep.mubr.bf16.mxu0 0
  %90 = vmatmul.mubr.bf16.gmra.mrb[0].mxu0 %v55
  %v91 = vpop.f32.mrb[0].mxu0
  %v92 = vadd.f32 0.0, %v91
  %v93 = vpop.f32.mrb[0].mxu0
  %v94 = vpop.f32.mrb[0].mxu0
  %v95 = vadd.f32 0.0, %v94
  %v96 = vpop.f32.mrb[0].mxu0
  %97 = vdwg.mxu0
  %v102 = vunpack.c.l.b16 %v30
  %v103 = vunpack.c.l.b16 %v31
  %v104 = vunpack.c.l.b16 %v32
  %v105 = vunpack.c.l.b16 %v33
  %v106 = vpack.c.b16 %v103, %v102
  %v107 = vpack.c.b16 %v105, %v104
  %110 = vmatprep.subr.bf16.mxu0 0
  %111 = vmatpush1.bf16.msra.mxu0 %v106
  %112 = vmatprep.subr.bf16.mxu0 0
  %113 = vmatpush1.bf16.msra.mxu0 %v107
  %114 = vmatprep.subr.bf16.mxu0 0
  %115 = vmatpush1.bf16.msra.mxu0 0
  %116 = vmatprep.subr.bf16.mxu0 0
  %117 = vmatpush1.bf16.msra.mxu0 0
  %118 = vmatprep.subr.bf16.mxu0 0
  %119 = vmatpush1.bf16.msra.mxu0 0
  %120 = vmatprep.subr.bf16.mxu0 0
  %121 = vmatpush1.bf16.msra.mxu0 0
  %122 = vmatprep.subr.bf16.mxu0 0
  %123 = vmatpush1.bf16.msra.mxu0 0
  %124 = vmatprep.subr.bf16.mxu0 0
  %125 = vmatpush1.bf16.msra.mxu0 0
  %126 = vmatprep.subr.bf16.mxu0 0
  %127 = vmatpush1.bf16.msra.mxu0 0
  %128 = vmatprep.subr.bf16.mxu0 0
  %129 = vmatpush1.bf16.msra.mxu0 0
  %130 = vmatprep.subr.bf16.mxu0 0
  %131 = vmatpush1.bf16.msra.mxu0 0
  %132 = vmatprep.subr.bf16.mxu0 0
  %133 = vmatpush1.bf16.msra.mxu0 0
  %134 = vmatprep.subr.bf16.mxu0 0
  %135 = vmatpush1.bf16.msra.mxu0 0
  %136 = vmatprep.subr.bf16.mxu0 0
  %137 = vmatpush1.bf16.msra.mxu0 0
  %138 = vmatprep.subr.bf16.mxu0 0
  %139 = vmatpush1.bf16.msra.mxu0 0
  %140 = vmatprep.subr.bf16.mxu0 0
  %141 = vmatpush1.bf16.msra.mxu0 0
  %142 = vmatprep.mubr.bf16.mxu0 0
  %143 = vmatmul.mubr.bf16.gmra.mrb[0].mxu0 %v55
  %v144 = vpop.f32.mrb[0].mxu0
  %v145 = vadd.f32 0.0, %v144
  %v146 = vpop.f32.mrb[0].mxu0
  %v147 = vpop.f32.mrb[0].mxu0
  %v148 = vadd.f32 0.0, %v147
  %v149 = vpop.f32.mrb[0].mxu0
  %150 = vdwg.mxu0
  %v151 = vlaneseq
  %v152 = vand.u32 %v151, 127
  %vm153 = vcmp.lt.s32.totalorder %v152, 49
  %v154 = vsel %vm153, %v92, -1e+30
  %v155 = vsel %vm153, %v95, -1e+30
  %v156 = vsel %vm153, %v145, -1e+30
  %v157 = vsel %vm153, %v148, -1e+30
  %158 = vmax.xlane.f32.xlu0 %v154
  %v159 = vpop.xlane.xlu0 %158
  %160 = vmax.xlane.f32.xlu0 %v155
  %v161 = vpop.xlane.xlu0 %160
  %162 = vmax.xlane.f32.xlu0 %v156
  %v163 = vpop.xlane.xlu0 %162
  %164 = vmax.xlane.f32.xlu0 %v157
  %v165 = vpop.xlane.xlu0 %164
  %v166 = vsub.f32 %v154, %v159
  %v167 = vsub.f32 %v155, %v161
  %v168 = vsub.f32 %v156, %v163
  %v169 = vsub.f32 %v157, %v165
  %v170 = vmul.f32 %v166, 1.442695
  %v171 = vpow.pop %v170
  %v172 = vmul.f32 %v167, 1.442695
  %v173 = vpow.pop %v172
  %v174 = vmul.f32 %v168, 1.442695
  %v175 = vpow.pop %v174
  %v176 = vmul.f32 %v169, 1.442695
  %v177 = vpow.pop %v176
  %178 = vadd.xlane.f32.xlu0 %v171
  %v179 = vpop.xlane.xlu0 %178
  %180 = vadd.xlane.f32.xlu0 %v173
  %v181 = vpop.xlane.xlu0 %180
  %182 = vadd.xlane.f32.xlu0 %v175
  %v183 = vpop.xlane.xlu0 %182
  %184 = vadd.xlane.f32.xlu0 %v177
  %v185 = vpop.xlane.xlu0 %184
  %v186 = vrcp.pop %v179
  %v187 = vrcp.pop %v181
  %v188 = vrcp.pop %v183
  %v189 = vrcp.pop %v185
  %v190 = vmul.f32 %v171, %v186
  %v191 = vmul.f32 %v173, %v187
  %v192 = vmul.f32 %v175, %v188
  %v193 = vmul.f32 %v177, %v189
  %v194 = vpack.c.bf16 %v191, %v190
  %v195 = vpack.c.bf16 %v193, %v192
  %196 = vmatprep.subr.bf16.mxu0 0
  %197 = vmatpush1.bf16.xpose.msra.mxu0 %v49
  %198 = vmatprep.subr.bf16.mxu0 0
  %199 = vmatpush1.bf16.xpose.msra.mxu0 %v50
  %200 = vmatprep.subr.bf16.mxu0 0
  %201 = vmatpush1.bf16.xpose.msra.mxu0 0
  %202 = vmatprep.subr.bf16.mxu0 0
  %203 = vmatpush1.bf16.xpose.msra.mxu0 0
  %204 = vmatprep.subr.bf16.mxu0 0
  %205 = vmatpush1.bf16.xpose.msra.mxu0 0
  %206 = vmatprep.subr.bf16.mxu0 0
  %207 = vmatpush1.bf16.xpose.msra.mxu0 0
  %208 = vmatprep.subr.bf16.mxu0 0
  %209 = vmatpush1.bf16.xpose.msra.mxu0 0
  %210 = vmatprep.subr.bf16.mxu0 0
  %211 = vmatpush1.bf16.xpose.msra.mxu0 0
  %212 = vmatprep.subr.bf16.mxu0 0
  %213 = vmatpush1.bf16.xpose.msra.mxu0 0
  %214 = vmatprep.subr.bf16.mxu0 0
  %215 = vmatpush1.bf16.xpose.msra.mxu0 0
  %216 = vmatprep.subr.bf16.mxu0 0
  %217 = vmatpush1.bf16.xpose.msra.mxu0 0
  %218 = vmatprep.subr.bf16.mxu0 0
  %219 = vmatpush1.bf16.xpose.msra.mxu0 0
  %220 = vmatprep.subr.bf16.mxu0 0
  %221 = vmatpush1.bf16.xpose.msra.mxu0 0
  %222 = vmatprep.subr.bf16.mxu0 0
  %223 = vmatpush1.bf16.xpose.msra.mxu0 0
  %224 = vmatprep.subr.bf16.mxu0 0
  %225 = vmatpush1.bf16.xpose.msra.mxu0 0
  %226 = vmatprep.subr.bf16.mxu0 0
  %227 = vmatpush1.bf16.xpose.msra.mxu0 0
  %228 = vmatprep.mubr.bf16.mxu0 0
  %229 = vmatmul.mubr.bf16.gmra.mrb[0].mxu0 %v194
  %v230 = vpop.f32.mrb[0].mxu0
  %v231 = vadd.f32 0.0, %v230
  %v232 = vpop.f32.mrb[0].mxu0
  %v233 = vpop.f32.mrb[0].mxu0
  %v234 = vadd.f32 0.0, %v233
  %v235 = vpop.f32.mrb[0].mxu0
  %236 = vdwg.mxu0
  %237 = vmatprep.subr.bf16.mxu0 0
  %238 = vmatpush1.bf16.xpose.msra.mxu0 %v106
  %239 = vmatprep.subr.bf16.mxu0 0
  %240 = vmatpush1.bf16.xpose.msra.mxu0 %v107
  %241 = vmatprep.subr.bf16.mxu0 0
  %242 = vmatpush1.bf16.xpose.msra.mxu0 0
  %243 = vmatprep.subr.bf16.mxu0 0
  %244 = vmatpush1.bf16.xpose.msra.mxu0 0
  %245 = vmatprep.subr.bf16.mxu0 0
  %246 = vmatpush1.bf16.xpose.msra.mxu0 0
  %247 = vmatprep.subr.bf16.mxu0 0
  %248 = vmatpush1.bf16.xpose.msra.mxu0 0
  %249 = vmatprep.subr.bf16.mxu0 0
  %250 = vmatpush1.bf16.xpose.msra.mxu0 0
  %251 = vmatprep.subr.bf16.mxu0 0
  %252 = vmatpush1.bf16.xpose.msra.mxu0 0
  %253 = vmatprep.subr.bf16.mxu0 0
  %254 = vmatpush1.bf16.xpose.msra.mxu0 0
  %255 = vmatprep.subr.bf16.mxu0 0
  %256 = vmatpush1.bf16.xpose.msra.mxu0 0
  %257 = vmatprep.subr.bf16.mxu0 0
  %258 = vmatpush1.bf16.xpose.msra.mxu0 0
  %259 = vmatprep.subr.bf16.mxu0 0
  %260 = vmatpush1.bf16.xpose.msra.mxu0 0
  %261 = vmatprep.subr.bf16.mxu0 0
  %262 = vmatpush1.bf16.xpose.msra.mxu0 0
  %263 = vmatprep.subr.bf16.mxu0 0
  %264 = vmatpush1.bf16.xpose.msra.mxu0 0
  %265 = vmatprep.subr.bf16.mxu0 0
  %266 = vmatpush1.bf16.xpose.msra.mxu0 0
  %267 = vmatprep.subr.bf16.mxu0 0
  %268 = vmatpush1.bf16.xpose.msra.mxu0 0
  %269 = vmatprep.mubr.bf16.mxu0 0
  %270 = vmatmul.mubr.bf16.gmra.mrb[0].mxu0 %v195
  %v271 = vpop.f32.mrb[0].mxu0
  %v272 = vadd.f32 0.0, %v271
  %v273 = vpop.f32.mrb[0].mxu0
  %v274 = vpop.f32.mrb[0].mxu0
  %v275 = vadd.f32 0.0, %v274
  %v276 = vpop.f32.mrb[0].mxu0
  %277 = vdwg.mxu0
  %v278 = vld [vmem:[%s2] sm:$0xff]
  %v279 = vld [vmem:[%s2 + $0x8] sm:$0xff]
  %v280 = vmul.f32 %v278, %v231
  %v281 = vmul.f32 %v279, %v234
  %v282 = vmul.f32 %v278, %v272
  %v283 = vmul.f32 %v279, %v275
  %v284 = vsel %vm53, %v280, 0.0
  %285 = vadd.xlane.f32.xlu0 %v284
  %v286 = vpop.xlane.xlu0 %285
  %v287 = vsel %vm53, %v281, 0.0
  %288 = vadd.xlane.f32.xlu0 %v287
  %v289 = vpop.xlane.xlu0 %288
  %v290 = vsel %vm53, %v282, 0.0
  %291 = vadd.xlane.f32.xlu0 %v290
  %v292 = vpop.xlane.xlu0 %291
  %v293 = vsel %vm53, %v283, 0.0
  %294 = vadd.xlane.f32.xlu0 %v293
  %v295 = vpop.xlane.xlu0 %294
  %v300 = vlaneseq
  %v301 = vshrl.u32 %v300, 7
  %v302 = vsub.s32 %v152, %v301
  %v303 = vrot.slane %v286, %v302
  %v304 = vadd.s32 %v152, 4294967288
  %v305 = vlaneseq
  %v306 = vshrl.u32 %v305, 7
  %v307 = vsub.s32 %v304, %v306
  %v308 = vrot.slane %v289, %v307
  %vm309 = vcmask 130112
  %v310 = vsel %vm309, %v308, %v303
  %v311 = vlaneseq
  %v312 = vshrl.u32 %v311, 7
  %v313 = vsub.s32 %v152, %v312
  %v314 = vrot.slane %v292, %v313
  %v315 = vlaneseq
  %v316 = vshrl.u32 %v315, 7
  %v317 = vsub.s32 %v304, %v316
  %v318 = vrot.slane %v295, %v317
  %v319 = vsel %vm309, %v318, %v314
  %vm320 = vcmask 1041409
  %v321 = vsel %vm320, %v319, %v310
  %vm323 = vcmask 123904
  %324 = vst.msk [vmem:[%s8] sm:$0x3] %vm323, %v321
  %v325 = vld [vmem:[%s3] sm:$0xff]
  %v326 = vld [vmem:[%s3 + $0x8] sm:$0xff]
  %v327 = vld [vmem:[%s3 + $0x10] sm:$0xff]
  %vm328 = vcmask 130048
  %v330 = vsel %vm328, %v325, 0
  %v333 = vsel %vm328, %v326, 0
  %v336 = vsel %vm328, %v327, 0
  %338 = vmatprep.subr.mxu0 0.0
  %339 = vmatpush1.msra.mxu0 %v190
  %340 = vmatprep.subr.mxu0 0.0
  %341 = vmatpush1.msra.mxu0 %v191
  %342 = vmatprep.subr.mxu0 0.0
  %343 = vmatpush1.msra.mxu0 0.0
  %344 = vmatprep.subr.mxu0 0.0
  %345 = vmatpush1.msra.mxu0 0.0
  %346 = vmatprep.subr.mxu0 0.0
  %347 = vmatpush1.msra.mxu0 0.0
  %348 = vmatprep.subr.mxu0 0.0
  %349 = vmatpush1.msra.mxu0 0.0
  %350 = vmatprep.subr.mxu0 0.0
  %351 = vmatpush1.msra.mxu0 0.0
  %352 = vmatprep.subr.mxu0 0.0
  %353 = vmatpush1.msra.mxu0 0.0
  %354 = vmatprep.subr.mxu0 0.0
  %355 = vmatpush1.msra.mxu0 0.0
  %356 = vmatprep.subr.mxu0 0.0
  %357 = vmatpush1.msra.mxu0 0.0
  %358 = vmatprep.subr.mxu0 0.0
  %359 = vmatpush1.msra.mxu0 0.0
  %360 = vmatprep.subr.mxu0 0.0
  %361 = vmatpush1.msra.mxu0 0.0
  %362 = vmatprep.subr.mxu0 0.0
  %363 = vmatpush1.msra.mxu0 0.0
  %364 = vmatprep.subr.mxu0 0.0
  %365 = vmatpush1.msra.mxu0 0.0
  %366 = vmatprep.subr.mxu0 0.0
  %367 = vmatpush1.msra.mxu0 0.0
  %368 = vmatprep.subr.mxu0 0.0
  %369 = vmatpush1.msra.mxu0 0.0
  %370 = vmatprep.subr.mxu0 0.0
  %371 = vmatpush1.msra.mxu0 0.0
  %372 = vmatprep.subr.mxu0 0.0
  %373 = vmatpush1.msra.mxu0 0.0
  %374 = vmatprep.subr.mxu0 0.0
  %375 = vmatpush1.msra.mxu0 0.0
  %376 = vmatprep.subr.mxu0 0.0
  %377 = vmatpush1.msra.mxu0 0.0
  %378 = vmatprep.subr.mxu0 0.0
  %379 = vmatpush1.msra.mxu0 0.0
  %380 = vmatprep.subr.mxu0 0.0
  %381 = vmatpush1.msra.mxu0 0.0
  %382 = vmatprep.subr.mxu0 0.0
  %383 = vmatpush1.msra.mxu0 0.0
  %384 = vmatprep.subr.mxu0 0.0
  %385 = vmatpush1.msra.mxu0 0.0
  %386 = vmatprep.subr.mxu0 0.0
  %387 = vmatpush1.msra.mxu0 0.0
  %388 = vmatprep.subr.mxu0 0.0
  %389 = vmatpush1.msra.mxu0 0.0
  %390 = vmatprep.subr.mxu0 0.0
  %391 = vmatpush1.msra.mxu0 0.0
  %392 = vmatprep.subr.mxu0 0.0
  %393 = vmatpush1.msra.mxu0 0.0
  %394 = vmatprep.subr.mxu0 0.0
  %395 = vmatpush1.msra.mxu0 0.0
  %396 = vmatprep.subr.mxu0 0.0
  %397 = vmatpush1.msra.mxu0 0.0
  %398 = vmatprep.subr.mxu0 0.0
  %399 = vmatpush1.msra.mxu0 0.0
  %400 = vmatprep.subr.mxu0 0.0
  %401 = vmatpush1.msra.mxu0 0.0
  %402 = vmatprep.mubr.f32.mxu0 0.0
  %403 = vmatmul.mubr.f32.gmra.mrb[0].mxu0 %v330
  %v404 = vpop.f32.mrb[0].mxu0
  %v405 = vadd.f32 0.0, %v404
  %v406 = vpop.f32.mrb[0].mxu0
  %407 = vmatprep.mubr.f32.mxu0 0.0
  %408 = vmatmul.mubr.f32.gmra.mrb[0].mxu0 %v333
  %v409 = vpop.f32.mrb[0].mxu0
  %v410 = vadd.f32 0.0, %v409
  %v411 = vpop.f32.mrb[0].mxu0
  %412 = vmatprep.mubr.f32.mxu0 0.0
  %413 = vmatmul.mubr.f32.gmra.mrb[0].mxu0 %v336
  %v414 = vpop.f32.mrb[0].mxu0
  %v415 = vadd.f32 0.0, %v414
  %v416 = vpop.f32.mrb[0].mxu0
  %417 = vdwg.mxu0
  %418 = vmatprep.subr.mxu0 0.0
  %419 = vmatpush1.msra.mxu0 %v192
  %420 = vmatprep.subr.mxu0 0.0
  %421 = vmatpush1.msra.mxu0 %v193
  %422 = vmatprep.subr.mxu0 0.0
  %423 = vmatpush1.msra.mxu0 0.0
  %424 = vmatprep.subr.mxu0 0.0
  %425 = vmatpush1.msra.mxu0 0.0
  %426 = vmatprep.subr.mxu0 0.0
  %427 = vmatpush1.msra.mxu0 0.0
  %428 = vmatprep.subr.mxu0 0.0
  %429 = vmatpush1.msra.mxu0 0.0
  %430 = vmatprep.subr.mxu0 0.0
  %431 = vmatpush1.msra.mxu0 0.0
  %432 = vmatprep.subr.mxu0 0.0
  %433 = vmatpush1.msra.mxu0 0.0
  %434 = vmatprep.subr.mxu0 0.0
  %435 = vmatpush1.msra.mxu0 0.0
  %436 = vmatprep.subr.mxu0 0.0
  %437 = vmatpush1.msra.mxu0 0.0
  %438 = vmatprep.subr.mxu0 0.0
  %439 = vmatpush1.msra.mxu0 0.0
  %440 = vmatprep.subr.mxu0 0.0
  %441 = vmatpush1.msra.mxu0 0.0
  %442 = vmatprep.subr.mxu0 0.0
  %443 = vmatpush1.msra.mxu0 0.0
  %444 = vmatprep.subr.mxu0 0.0
  %445 = vmatpush1.msra.mxu0 0.0
  %446 = vmatprep.subr.mxu0 0.0
  %447 = vmatpush1.msra.mxu0 0.0
  %448 = vmatprep.subr.mxu0 0.0
  %449 = vmatpush1.msra.mxu0 0.0
  %450 = vmatprep.subr.mxu0 0.0
  %451 = vmatpush1.msra.mxu0 0.0
  %452 = vmatprep.subr.mxu0 0.0
  %453 = vmatpush1.msra.mxu0 0.0
  %454 = vmatprep.subr.mxu0 0.0
  %455 = vmatpush1.msra.mxu0 0.0
  %456 = vmatprep.subr.mxu0 0.0
  %457 = vmatpush1.msra.mxu0 0.0
  %458 = vmatprep.subr.mxu0 0.0
  %459 = vmatpush1.msra.mxu0 0.0
  %460 = vmatprep.subr.mxu0 0.0
  %461 = vmatpush1.msra.mxu0 0.0
  %462 = vmatprep.subr.mxu0 0.0
  %463 = vmatpush1.msra.mxu0 0.0
  %464 = vmatprep.subr.mxu0 0.0
  %465 = vmatpush1.msra.mxu0 0.0
  %466 = vmatprep.subr.mxu0 0.0
  %467 = vmatpush1.msra.mxu0 0.0
  %468 = vmatprep.subr.mxu0 0.0
  %469 = vmatpush1.msra.mxu0 0.0
  %470 = vmatprep.subr.mxu0 0.0
  %471 = vmatpush1.msra.mxu0 0.0
  %472 = vmatprep.subr.mxu0 0.0
  %473 = vmatpush1.msra.mxu0 0.0
  %474 = vmatprep.subr.mxu0 0.0
  %475 = vmatpush1.msra.mxu0 0.0
  %476 = vmatprep.subr.mxu0 0.0
  %477 = vmatpush1.msra.mxu0 0.0
  %478 = vmatprep.subr.mxu0 0.0
  %479 = vmatpush1.msra.mxu0 0.0
  %480 = vmatprep.subr.mxu0 0.0
  %481 = vmatpush1.msra.mxu0 0.0
  %482 = vmatprep.mubr.f32.mxu0 0.0
  %483 = vmatmul.mubr.f32.gmra.mrb[0].mxu0 %v330
  %v484 = vpop.f32.mrb[0].mxu0
  %v485 = vadd.f32 0.0, %v484
  %v486 = vpop.f32.mrb[0].mxu0
  %487 = vmatprep.mubr.f32.mxu0 0.0
  %488 = vmatmul.mubr.f32.gmra.mrb[0].mxu0 %v333
  %v489 = vpop.f32.mrb[0].mxu0
  %v490 = vadd.f32 0.0, %v489
  %v491 = vpop.f32.mrb[0].mxu0
  %492 = vmatprep.mubr.f32.mxu0 0.0
  %493 = vmatmul.mubr.f32.gmra.mrb[0].mxu0 %v336
  %v494 = vpop.f32.mrb[0].mxu0
  %v495 = vadd.f32 0.0, %v494
  %v496 = vpop.f32.mrb[0].mxu0
  %497 = vdwg.mxu0
  %498 = vst [vmem:[%s6] sm:$0xff] %v405
  %499 = vst [vmem:[%s6 + $0x8] sm:$0xff] %v410
  %500 = vst [vmem:[%s6 + $0x10] sm:$0xff] %v415
  %501 = vst [vmem:[%s6 + $0x18] sm:$0xff] %v485
  %502 = vst [vmem:[%s6 + $0x20] sm:$0xff] %v490
  %503 = vst [vmem:[%s6 + $0x28] sm:$0xff] %v495
  %504 = vmatprep.subr.mxu0 0.0
  %505 = vmatpush1.msra.mxu0 %v92
  %506 = vmatprep.subr.mxu0 0.0
  %507 = vmatpush1.msra.mxu0 %v95
  %508 = vmatprep.subr.mxu0 0.0
  %509 = vmatpush1.msra.mxu0 0.0
  %510 = vmatprep.subr.mxu0 0.0
  %511 = vmatpush1.msra.mxu0 0.0
  %512 = vmatprep.subr.mxu0 0.0
  %513 = vmatpush1.msra.mxu0 0.0
  %514 = vmatprep.subr.mxu0 0.0
  %515 = vmatpush1.msra.mxu0 0.0
  %516 = vmatprep.subr.mxu0 0.0
  %517 = vmatpush1.msra.mxu0 0.0
  %518 = vmatprep.subr.mxu0 0.0
  %519 = vmatpush1.msra.mxu0 0.0
  %520 = vmatprep.subr.mxu0 0.0
  %521 = vmatpush1.msra.mxu0 0.0
  %522 = vmatprep.subr.mxu0 0.0
  %523 = vmatpush1.msra.mxu0 0.0
  %524 = vmatprep.subr.mxu0 0.0
  %525 = vmatpush1.msra.mxu0 0.0
  %526 = vmatprep.subr.mxu0 0.0
  %527 = vmatpush1.msra.mxu0 0.0
  %528 = vmatprep.subr.mxu0 0.0
  %529 = vmatpush1.msra.mxu0 0.0
  %530 = vmatprep.subr.mxu0 0.0
  %531 = vmatpush1.msra.mxu0 0.0
  %532 = vmatprep.subr.mxu0 0.0
  %533 = vmatpush1.msra.mxu0 0.0
  %534 = vmatprep.subr.mxu0 0.0
  %535 = vmatpush1.msra.mxu0 0.0
  %536 = vmatprep.subr.mxu0 0.0
  %537 = vmatpush1.msra.mxu0 0.0
  %538 = vmatprep.subr.mxu0 0.0
  %539 = vmatpush1.msra.mxu0 0.0
  %540 = vmatprep.subr.mxu0 0.0
  %541 = vmatpush1.msra.mxu0 0.0
  %542 = vmatprep.subr.mxu0 0.0
  %543 = vmatpush1.msra.mxu0 0.0
  %544 = vmatprep.subr.mxu0 0.0
  %545 = vmatpush1.msra.mxu0 0.0
  %546 = vmatprep.subr.mxu0 0.0
  %547 = vmatpush1.msra.mxu0 0.0
  %548 = vmatprep.subr.mxu0 0.0
  %549 = vmatpush1.msra.mxu0 0.0
  %550 = vmatprep.subr.mxu0 0.0
  %551 = vmatpush1.msra.mxu0 0.0
  %552 = vmatprep.subr.mxu0 0.0
  %553 = vmatpush1.msra.mxu0 0.0
  %554 = vmatprep.subr.mxu0 0.0
  %555 = vmatpush1.msra.mxu0 0.0
  %556 = vmatprep.subr.mxu0 0.0
  %557 = vmatpush1.msra.mxu0 0.0
  %558 = vmatprep.subr.mxu0 0.0
  %559 = vmatpush1.msra.mxu0 0.0
  %560 = vmatprep.subr.mxu0 0.0
  %561 = vmatpush1.msra.mxu0 0.0
  %562 = vmatprep.subr.mxu0 0.0
  %563 = vmatpush1.msra.mxu0 0.0
  %564 = vmatprep.subr.mxu0 0.0
  %565 = vmatpush1.msra.mxu0 0.0
  %566 = vmatprep.subr.mxu0 0.0
  %567 = vmatpush1.msra.mxu0 0.0
  %568 = vmatprep.mubr.f32.mxu0 0.0
  %569 = vmatmul.mubr.f32.gmra.mrb[0].mxu0 %v330
  %v570 = vpop.f32.mrb[0].mxu0
  %v571 = vadd.f32 0.0, %v570
  %v572 = vpop.f32.mrb[0].mxu0
  %573 = vmatprep.mubr.f32.mxu0 0.0
  %574 = vmatmul.mubr.f32.gmra.mrb[0].mxu0 %v333
  %v575 = vpop.f32.mrb[0].mxu0
  %v576 = vadd.f32 0.0, %v575
  %v577 = vpop.f32.mrb[0].mxu0
  %578 = vmatprep.mubr.f32.mxu0 0.0
  %579 = vmatmul.mubr.f32.gmra.mrb[0].mxu0 %v336
  %v580 = vpop.f32.mrb[0].mxu0
  %v581 = vadd.f32 0.0, %v580
  %v582 = vpop.f32.mrb[0].mxu0
  %583 = vdwg.mxu0
  %584 = vmatprep.subr.mxu0 0.0
  %585 = vmatpush1.msra.mxu0 %v145
  %586 = vmatprep.subr.mxu0 0.0
  %587 = vmatpush1.msra.mxu0 %v148
  %588 = vmatprep.subr.mxu0 0.0
  %589 = vmatpush1.msra.mxu0 0.0
  %590 = vmatprep.subr.mxu0 0.0
  %591 = vmatpush1.msra.mxu0 0.0
  %592 = vmatprep.subr.mxu0 0.0
  %593 = vmatpush1.msra.mxu0 0.0
  %594 = vmatprep.subr.mxu0 0.0
  %595 = vmatpush1.msra.mxu0 0.0
  %596 = vmatprep.subr.mxu0 0.0
  %597 = vmatpush1.msra.mxu0 0.0
  %598 = vmatprep.subr.mxu0 0.0
  %599 = vmatpush1.msra.mxu0 0.0
  %600 = vmatprep.subr.mxu0 0.0
  %601 = vmatpush1.msra.mxu0 0.0
  %602 = vmatprep.subr.mxu0 0.0
  %603 = vmatpush1.msra.mxu0 0.0
  %604 = vmatprep.subr.mxu0 0.0
  %605 = vmatpush1.msra.mxu0 0.0
  %606 = vmatprep.subr.mxu0 0.0
  %607 = vmatpush1.msra.mxu0 0.0
  %608 = vmatprep.subr.mxu0 0.0
  %609 = vmatpush1.msra.mxu0 0.0
  %610 = vmatprep.subr.mxu0 0.0
  %611 = vmatpush1.msra.mxu0 0.0
  %612 = vmatprep.subr.mxu0 0.0
  %613 = vmatpush1.msra.mxu0 0.0
  %614 = vmatprep.subr.mxu0 0.0
  %615 = vmatpush1.msra.mxu0 0.0
  %616 = vmatprep.subr.mxu0 0.0
  %617 = vmatpush1.msra.mxu0 0.0
  %618 = vmatprep.subr.mxu0 0.0
  %619 = vmatpush1.msra.mxu0 0.0
  %620 = vmatprep.subr.mxu0 0.0
  %621 = vmatpush1.msra.mxu0 0.0
  %622 = vmatprep.subr.mxu0 0.0
  %623 = vmatpush1.msra.mxu0 0.0
  %624 = vmatprep.subr.mxu0 0.0
  %625 = vmatpush1.msra.mxu0 0.0
  %626 = vmatprep.subr.mxu0 0.0
  %627 = vmatpush1.msra.mxu0 0.0
  %628 = vmatprep.subr.mxu0 0.0
  %629 = vmatpush1.msra.mxu0 0.0
  %630 = vmatprep.subr.mxu0 0.0
  %631 = vmatpush1.msra.mxu0 0.0
  %632 = vmatprep.subr.mxu0 0.0
  %633 = vmatpush1.msra.mxu0 0.0
  %634 = vmatprep.subr.mxu0 0.0
  %635 = vmatpush1.msra.mxu0 0.0
  %636 = vmatprep.subr.mxu0 0.0
  %637 = vmatpush1.msra.mxu0 0.0
  %638 = vmatprep.subr.mxu0 0.0
  %639 = vmatpush1.msra.mxu0 0.0
  %640 = vmatprep.subr.mxu0 0.0
  %641 = vmatpush1.msra.mxu0 0.0
  %642 = vmatprep.subr.mxu0 0.0
  %643 = vmatpush1.msra.mxu0 0.0
  %644 = vmatprep.subr.mxu0 0.0
  %645 = vmatpush1.msra.mxu0 0.0
  %646 = vmatprep.subr.mxu0 0.0
  %647 = vmatpush1.msra.mxu0 0.0
  %648 = vmatprep.mubr.f32.mxu0 0.0
  %649 = vmatmul.mubr.f32.gmra.mrb[0].mxu0 %v330
  %v650 = vpop.f32.mrb[0].mxu0
  %v651 = vadd.f32 0.0, %v650
  %v652 = vpop.f32.mrb[0].mxu0
  %653 = vmatprep.mubr.f32.mxu0 0.0
  %654 = vmatmul.mubr.f32.gmra.mrb[0].mxu0 %v333
  %v655 = vpop.f32.mrb[0].mxu0
  %v656 = vadd.f32 0.0, %v655
  %v657 = vpop.f32.mrb[0].mxu0
  %658 = vmatprep.mubr.f32.mxu0 0.0
  %659 = vmatmul.mubr.f32.gmra.mrb[0].mxu0 %v336
  %v660 = vpop.f32.mrb[0].mxu0
  %v661 = vadd.f32 0.0, %v660
  %v662 = vpop.f32.mrb[0].mxu0
  %663 = vdwg.mxu0
  %664 = vst [vmem:[%s5] sm:$0xff] %v571
  %665 = vst [vmem:[%s5 + $0x8] sm:$0xff] %v576
  %666 = vst [vmem:[%s5 + $0x10] sm:$0xff] %v581
  %667 = vst [vmem:[%s5 + $0x18] sm:$0xff] %v651
  %668 = vst [vmem:[%s5 + $0x20] sm:$0xff] %v656
  %669 = vst [vmem:[%s5 + $0x28] sm:$0xff] %v661
  %670 = vmatprep.subr.mxu0 0.0
  %671 = vmatpush1.msra.mxu0 %v231
  %672 = vmatprep.subr.mxu0 0.0
  %673 = vmatpush1.msra.mxu0 %v234
  %674 = vmatprep.subr.mxu0 0.0
  %675 = vmatpush1.msra.mxu0 0.0
  %676 = vmatprep.subr.mxu0 0.0
  %677 = vmatpush1.msra.mxu0 0.0
  %678 = vmatprep.subr.mxu0 0.0
  %679 = vmatpush1.msra.mxu0 0.0
  %680 = vmatprep.subr.mxu0 0.0
  %681 = vmatpush1.msra.mxu0 0.0
  %682 = vmatprep.subr.mxu0 0.0
  %683 = vmatpush1.msra.mxu0 0.0
  %684 = vmatprep.subr.mxu0 0.0
  %685 = vmatpush1.msra.mxu0 0.0
  %686 = vmatprep.subr.mxu0 0.0
  %687 = vmatpush1.msra.mxu0 0.0
  %688 = vmatprep.subr.mxu0 0.0
  %689 = vmatpush1.msra.mxu0 0.0
  %690 = vmatprep.subr.mxu0 0.0
  %691 = vmatpush1.msra.mxu0 0.0
  %692 = vmatprep.subr.mxu0 0.0
  %693 = vmatpush1.msra.mxu0 0.0
  %694 = vmatprep.subr.mxu0 0.0
  %695 = vmatpush1.msra.mxu0 0.0
  %696 = vmatprep.subr.mxu0 0.0
  %697 = vmatpush1.msra.mxu0 0.0
  %698 = vmatprep.subr.mxu0 0.0
  %699 = vmatpush1.msra.mxu0 0.0
  %700 = vmatprep.subr.mxu0 0.0
  %701 = vmatpush1.msra.mxu0 0.0
  %702 = vmatprep.subr.mxu0 0.0
  %703 = vmatpush1.msra.mxu0 0.0
  %704 = vmatprep.subr.mxu0 0.0
  %705 = vmatpush1.msra.mxu0 0.0
  %706 = vmatprep.subr.mxu0 0.0
  %707 = vmatpush1.msra.mxu0 0.0
  %708 = vmatprep.subr.mxu0 0.0
  %709 = vmatpush1.msra.mxu0 0.0
  %710 = vmatprep.subr.mxu0 0.0
  %711 = vmatpush1.msra.mxu0 0.0
  %712 = vmatprep.subr.mxu0 0.0
  %713 = vmatpush1.msra.mxu0 0.0
  %714 = vmatprep.subr.mxu0 0.0
  %715 = vmatpush1.msra.mxu0 0.0
  %716 = vmatprep.subr.mxu0 0.0
  %717 = vmatpush1.msra.mxu0 0.0
  %718 = vmatprep.subr.mxu0 0.0
  %719 = vmatpush1.msra.mxu0 0.0
  %720 = vmatprep.subr.mxu0 0.0
  %721 = vmatpush1.msra.mxu0 0.0
  %722 = vmatprep.subr.mxu0 0.0
  %723 = vmatpush1.msra.mxu0 0.0
  %724 = vmatprep.subr.mxu0 0.0
  %725 = vmatpush1.msra.mxu0 0.0
  %726 = vmatprep.subr.mxu0 0.0
  %727 = vmatpush1.msra.mxu0 0.0
  %728 = vmatprep.subr.mxu0 0.0
  %729 = vmatpush1.msra.mxu0 0.0
  %730 = vmatprep.subr.mxu0 0.0
  %731 = vmatpush1.msra.mxu0 0.0
  %732 = vmatprep.subr.mxu0 0.0
  %733 = vmatpush1.msra.mxu0 0.0
  %734 = vmatprep.mubr.f32.mxu0 0.0
  %735 = vmatmul.mubr.f32.gmra.mrb[0].mxu0 %v330
  %v736 = vpop.f32.mrb[0].mxu0
  %v737 = vadd.f32 0.0, %v736
  %v738 = vpop.f32.mrb[0].mxu0
  %739 = vmatprep.mubr.f32.mxu0 0.0
  %740 = vmatmul.mubr.f32.gmra.mrb[0].mxu0 %v333
  %v741 = vpop.f32.mrb[0].mxu0
  %v742 = vadd.f32 0.0, %v741
  %v743 = vpop.f32.mrb[0].mxu0
  %744 = vmatprep.mubr.f32.mxu0 0.0
  %745 = vmatmul.mubr.f32.gmra.mrb[0].mxu0 %v336
  %v746 = vpop.f32.mrb[0].mxu0
  %v747 = vadd.f32 0.0, %v746
  %v748 = vpop.f32.mrb[0].mxu0
  %749 = vdwg.mxu0
  %750 = vmatprep.subr.mxu0 0.0
  %751 = vmatpush1.msra.mxu0 %v272
  %752 = vmatprep.subr.mxu0 0.0
  %753 = vmatpush1.msra.mxu0 %v275
  %754 = vmatprep.subr.mxu0 0.0
  %755 = vmatpush1.msra.mxu0 0.0
  %756 = vmatprep.subr.mxu0 0.0
  %757 = vmatpush1.msra.mxu0 0.0
  %758 = vmatprep.subr.mxu0 0.0
  %759 = vmatpush1.msra.mxu0 0.0
  %760 = vmatprep.subr.mxu0 0.0
  %761 = vmatpush1.msra.mxu0 0.0
  %762 = vmatprep.subr.mxu0 0.0
  %763 = vmatpush1.msra.mxu0 0.0
  %764 = vmatprep.subr.mxu0 0.0
  %765 = vmatpush1.msra.mxu0 0.0
  %766 = vmatprep.subr.mxu0 0.0
  %767 = vmatpush1.msra.mxu0 0.0
  %768 = vmatprep.subr.mxu0 0.0
  %769 = vmatpush1.msra.mxu0 0.0
  %770 = vmatprep.subr.mxu0 0.0
  %771 = vmatpush1.msra.mxu0 0.0
  %772 = vmatprep.subr.mxu0 0.0
  %773 = vmatpush1.msra.mxu0 0.0
  %774 = vmatprep.subr.mxu0 0.0
  %775 = vmatpush1.msra.mxu0 0.0
  %776 = vmatprep.subr.mxu0 0.0
  %777 = vmatpush1.msra.mxu0 0.0
  %778 = vmatprep.subr.mxu0 0.0
  %779 = vmatpush1.msra.mxu0 0.0
  %780 = vmatprep.subr.mxu0 0.0
  %781 = vmatpush1.msra.mxu0 0.0
  %782 = vmatprep.subr.mxu0 0.0
  %783 = vmatpush1.msra.mxu0 0.0
  %784 = vmatprep.subr.mxu0 0.0
  %785 = vmatpush1.msra.mxu0 0.0
  %786 = vmatprep.subr.mxu0 0.0
  %787 = vmatpush1.msra.mxu0 0.0
  %788 = vmatprep.subr.mxu0 0.0
  %789 = vmatpush1.msra.mxu0 0.0
  %790 = vmatprep.subr.mxu0 0.0
  %791 = vmatpush1.msra.mxu0 0.0
  %792 = vmatprep.subr.mxu0 0.0
  %793 = vmatpush1.msra.mxu0 0.0
  %794 = vmatprep.subr.mxu0 0.0
  %795 = vmatpush1.msra.mxu0 0.0
  %796 = vmatprep.subr.mxu0 0.0
  %797 = vmatpush1.msra.mxu0 0.0
  %798 = vmatprep.subr.mxu0 0.0
  %799 = vmatpush1.msra.mxu0 0.0
  %800 = vmatprep.subr.mxu0 0.0
  %801 = vmatpush1.msra.mxu0 0.0
  %802 = vmatprep.subr.mxu0 0.0
  %803 = vmatpush1.msra.mxu0 0.0
  %804 = vmatprep.subr.mxu0 0.0
  %805 = vmatpush1.msra.mxu0 0.0
  %806 = vmatprep.subr.mxu0 0.0
  %807 = vmatpush1.msra.mxu0 0.0
  %808 = vmatprep.subr.mxu0 0.0
  %809 = vmatpush1.msra.mxu0 0.0
  %810 = vmatprep.subr.mxu0 0.0
  %811 = vmatpush1.msra.mxu0 0.0
  %812 = vmatprep.subr.mxu0 0.0
  %813 = vmatpush1.msra.mxu0 0.0
  %814 = vmatprep.mubr.f32.mxu0 0.0
  %815 = vmatmul.mubr.f32.gmra.mrb[0].mxu0 %v330
  %v816 = vpop.f32.mrb[0].mxu0
  %v817 = vadd.f32 0.0, %v816
  %v818 = vpop.f32.mrb[0].mxu0
  %819 = vmatprep.mubr.f32.mxu0 0.0
  %820 = vmatmul.mubr.f32.gmra.mrb[0].mxu0 %v333
  %v821 = vpop.f32.mrb[0].mxu0
  %v822 = vadd.f32 0.0, %v821
  %v823 = vpop.f32.mrb[0].mxu0
  %824 = vmatprep.mubr.f32.mxu0 0.0
  %825 = vmatmul.mubr.f32.gmra.mrb[0].mxu0 %v336
  %v826 = vpop.f32.mrb[0].mxu0
  %v827 = vadd.f32 0.0, %v826
  %v828 = vpop.f32.mrb[0].mxu0
  %829 = vdwg.mxu0
  %830 = vst.msk [vmem:[%s7] sm:$0xff] %vm53, %v737
  %831 = vst.msk [vmem:[%s7 + $0x8] sm:$0xff] %vm53, %v742
  %832 = vst.msk [vmem:[%s7 + $0x10] sm:$0xff] %vm53, %v747
  %833 = vst.msk [vmem:[%s7 + $0x18] sm:$0xff] %vm53, %v817
  %834 = vst.msk [vmem:[%s7 + $0x20] sm:$0xff] %vm53, %v822
  %835 = vst.msk [vmem:[%s7 + $0x28] sm:$0xff] %vm53, %v827
  %v836 = vld [vmem:[%s4] sm:$0x1]
  %v837 = vld [vmem:[%s4 + $0x1] sm:$0x1]
  %v838 = vlaneseq
  %v839 = vshrl.u32 %v838, 7
  %v840 = vsub.s32 0, %v839
  %v841 = vrot.slane %v836, %v840
  %v842 = vmul.f32 %v405, %v841
  %v843 = vmul.f32 %v410, %v841
  %v844 = vmul.f32 %v415, %v841
  %v845 = vmul.f32 %v485, %v841
  %v846 = vmul.f32 %v490, %v841
  %v847 = vmul.f32 %v495, %v841
  %848 = vadd.xlane.f32.xlu0 %v842
  %v849 = vpop.xlane.xlu0 %848
  %850 = vadd.xlane.f32.xlu0 %v843
  %v851 = vpop.xlane.xlu0 %850
  %852 = vadd.xlane.f32.xlu0 %v844
  %v853 = vpop.xlane.xlu0 %852
  %854 = vadd.xlane.f32.xlu0 %v845
  %v855 = vpop.xlane.xlu0 %854
  %856 = vadd.xlane.f32.xlu0 %v846
  %v857 = vpop.xlane.xlu0 %856
  %858 = vadd.xlane.f32.xlu0 %v847
  %v859 = vpop.xlane.xlu0 %858
  %v860 = vlaneseq
  %v861 = vshrl.u32 %v860, 7
  %v862 = vsub.s32 0, %v861
  %v863 = vrot.slane %v837, %v862
  %v864 = vmul.f32 %v405, %v863
  %v865 = vmul.f32 %v410, %v863
  %v866 = vmul.f32 %v415, %v863
  %v867 = vmul.f32 %v485, %v863
  %v868 = vmul.f32 %v490, %v863
  %v869 = vmul.f32 %v495, %v863
  %870 = vadd.xlane.f32.xlu0 %v864
  %v871 = vpop.xlane.xlu0 %870
  %872 = vadd.xlane.f32.xlu0 %v865
  %v873 = vpop.xlane.xlu0 %872
  %874 = vadd.xlane.f32.xlu0 %v866
  %v875 = vpop.xlane.xlu0 %874
  %876 = vadd.xlane.f32.xlu0 %v867
  %v877 = vpop.xlane.xlu0 %876
  %878 = vadd.xlane.f32.xlu0 %v868
  %v879 = vpop.xlane.xlu0 %878
  %880 = vadd.xlane.f32.xlu0 %v869
  %v881 = vpop.xlane.xlu0 %880
  %vm882 = vcmask 7168
  %v883 = vsel %vm882, %v849, %v871
  %v884 = vsel %vm882, %v851, %v873
  %v885 = vsel %vm882, %v853, %v875
  %v886 = vsel %vm882, %v855, %v877
  %v887 = vsel %vm882, %v857, %v879
  %v888 = vsel %vm882, %v859, %v881
  %vm889 = vcmask 15360
  %890 = vst.msk [vmem:[%s9] sm:$0xff] %vm889, %v883
  %891 = vst.msk [vmem:[%s9 + $0x8] sm:$0xff] %vm889, %v884
  %892 = vst.msk [vmem:[%s9 + $0x10] sm:$0xff] %vm889, %v885
  %893 = vst.msk [vmem:[%s9 + $0x18] sm:$0xff] %vm889, %v886
  %894 = vst.msk [vmem:[%s9 + $0x20] sm:$0xff] %vm889, %v887
  %895 = vst.msk [vmem:[%s9 + $0x28] sm:$0xff] %vm889, %v888
  // Predicated region
  $region22: #{cross_attention_forward.2} parent=0 // pred_check
    _
  $region23: #{cross_attention_forward.2} parent=0 // pred_check_branch
    %897 = sbr.rel (0) target = $region25
  $region24: #{cross_attention_forward.2} parent=0 // pred_region
    _
  $region25: #{cross_attention_forward.2} parent=0 // pred_fallthru
    _
  // Predicated region
  $region26: #{cross_attention_forward.2} parent=0 // pred_check
    _
  $region27: #{cross_attention_forward.2} parent=0 // pred_check_branch
    %899 = sbr.rel (0) target = $region29
  $region28: #{cross_attention_forward.2} parent=0 // pred_region
    _
  $region29: #{cross_attention_forward.2} parent=0 // pred_fallthru
    _
  // Predicated region
  $region30: #{cross_attention_forward.2} parent=0 // pred_check
    _
  $region31: #{cross_attention_forward.2} parent=0 // pred_check_branch
    %901 = sbr.rel (0) target = $region33
  $region32: #{cross_attention_forward.2} parent=0 // pred_region
    _
  $region33: #{cross_attention_forward.2} parent=0 // pred_fallthru
    _
  // Predicated region
  $region34: #{cross_attention_forward.2} parent=0 // pred_check
    _
  $region35: #{cross_attention_forward.2} parent=0 // pred_check_branch
    %903 = sbr.rel (0) target = $region37
  $region36: #{cross_attention_forward.2} parent=0 // pred_region
    _
  $region37: #{cross_attention_forward.2} parent=0 // pred_fallthru
    _
  // Predicated region
  $region38: #{cross_attention_forward.2} parent=0 // pred_check
    _
  $region39: #{cross_attention_forward.2} parent=0 // pred_check_branch
    %905 = sbr.rel (0) target = $region41
  $region40: #{cross_attention_forward.2} parent=0 // pred_region
    _
  $region41: #{cross_attention_forward.2} parent=0 // pred_fallthru
    _
  // Predicated region
  $region42: #{cross_attention_forward.2} parent=0 // pred_check
    _
  $region43: #{cross_attention_forward.2} parent=0 // pred_check_branch
    %907 = sbr.rel (0) target = $region45
  $region44: #{cross_attention_forward.2} parent=0 // pred_region
    _
  $region45: #{cross_attention_forward.2} parent=0 // pred_fallthru
    _
  // Predicated region
  $region46: #{cross_attention_forward.2} parent=0 // pred_check
    _
  $region47: #{cross_attention_forward.2} parent=0 // pred_check_branch
    %909 = sbr.rel (0) target = $region49
  $region48: #{cross_attention_forward.2} parent=0 // pred_region
    _
  $region49: #{cross_attention_forward.2} parent=0 // pred_fallthru
    _
  // Predicated region
  $region50: #{cross_attention_forward.2} parent=0 // pred_check
    _
  $region51: #{cross_attention_forward.2} parent=0 // pred_check_branch
    %911 = sbr.rel (0) target = $region53
  $region52: #{cross_attention_forward.2} parent=0 // pred_region
    _
  $region53: #{cross_attention_forward.2} parent=0 // pred_fallthru
    _
  // Predicated region
  $region54: #{cross_attention_forward.2} parent=0 // pred_check
    _
  $region55: #{cross_attention_forward.2} parent=0 // pred_check_branch
    %913 = sbr.rel (0) target = $region57
  $region56: #{cross_attention_forward.2} parent=0 // pred_region
    _
  $region57: #{cross_attention_forward.2} parent=0 // pred_fallthru
    _
  // Predicated region
  $region58: #{cross_attention_forward.2} parent=0 // pred_check
    _
  $region59: #{cross_attention_forward.2} parent=0 // pred_check_branch
    %915 = sbr.rel (0) target = $region61
  $region60: #{cross_attention_forward.2} parent=0 // pred_region
    _
  $region61: #{cross_attention_forward.2} parent=0 // pred_fallthru
    _

// kernel: cross_attention_forward.3
$region0: #{cross_attention_forward.3}
  #allocation0 [shape = 'u32[]', space=smem, size = 0x4, offset = 0x4, fixed_abs, tag = 'smem constant byte address 0x4 - core index']
  #allocation1 [shape = 'u32[144,128]{1,0:T(1,128)}', space=vmem, size = 0x12000, scoped, tag = 'internal scratch']
  %s0 = inlined_call_operand.vmem [shape: f32[2,24,5], index: 0, kind: input, shape index: {}]
  %s1 = inlined_call_operand.vmem [shape: f32[2,128], index: 1, kind: input, shape index: {}]
  %s2 = inlined_call_operand.vmem [shape: bf16[2,32,128], index: 2, kind: input, shape index: {}]
  %s3 = inlined_call_operand.vmem [shape: f32[2,24,128], index: 3, kind: output, shape index: {0}]
  %s4 = inlined_call_operand.vmem [shape: f32[2,24,32], index: 4, kind: output, shape index: {1}]
  %5 = xla_tuple %s3, %s4
  %s6 = sld [smem:[#allocation0]]
  $region30: #{cross_attention_forward.3} parent=0
    _
  %s8 = ssub.s32 1, %s6
  %s9 = scalar_select 0, %s8, %s6
  // Predicated region
  $region2: #{cross_attention_forward.3} parent=0 // pred_check
    _
  $region3: #{cross_attention_forward.3} parent=0 // pred_check_branch
    %11 = sbr.rel (0) target = $region5
  $region4: #{cross_attention_forward.3} parent=0 // pred_region
    _
  $region5: #{cross_attention_forward.3} parent=0 // pred_fallthru
    _
  // Predicated region
  $region6: #{cross_attention_forward.3} parent=0 // pred_check
    _
  $region7: #{cross_attention_forward.3} parent=0 // pred_check_branch
    %13 = sbr.rel (0) target = $region9
  $region8: #{cross_attention_forward.3} parent=0 // pred_region
    _
  $region9: #{cross_attention_forward.3} parent=0 // pred_fallthru
    _
  // Predicated region
  $region10: #{cross_attention_forward.3} parent=0 // pred_check
    _
  $region11: #{cross_attention_forward.3} parent=0 // pred_check_branch
    %15 = sbr.rel (0) target = $region13
  $region12: #{cross_attention_forward.3} parent=0 // pred_region
    _
  $region13: #{cross_attention_forward.3} parent=0 // pred_fallthru
    _
  %v17 = vld [vmem:[%s0] sm:$0xff]
  %v18 = vld [vmem:[%s0 + $0x8] sm:$0xff]
  %v19 = vld [vmem:[%s0 + $0x10] sm:$0xff]
  %v20 = vld [vmem:[%s0 + $0x18] sm:$0xff]
  %v21 = vld [vmem:[%s0 + $0x20] sm:$0xff]
  %v22 = vld [vmem:[%s0 + $0x28] sm:$0xff]
  %v23 = vld [vmem:[%s1] sm:$0x1]
  %v24 = vld [vmem:[%s1 + $0x1] sm:$0x1]
  %v25 = vlaneseq
  %v26 = vshrl.u32 %v25, 7
  %v27 = vsub.s32 0, %v26
  %v28 = vrot.slane %v23, %v27
  %30 = vset.pattern.permute.xlu0 0
  %31 = vperm.xlu0 %30, %v17
  %v32 = vpop.permute.xlu0 %31
  %35 = vset.pattern.permute.xlu0 0
  %36 = vperm.xlu0 %35, %v18
  %v37 = vpop.permute.xlu0 %36
  %40 = vset.pattern.permute.xlu0 0
  %41 = vperm.xlu0 %40, %v19
  %v42 = vpop.permute.xlu0 %41
  %45 = vset.pattern.permute.xlu0 0
  %46 = vperm.xlu0 %45, %v20
  %v47 = vpop.permute.xlu0 %46
  %50 = vset.pattern.permute.xlu0 0
  %51 = vperm.xlu0 %50, %v21
  %v52 = vpop.permute.xlu0 %51
  %55 = vset.pattern.permute.xlu0 0
  %56 = vperm.xlu0 %55, %v22
  %v57 = vpop.permute.xlu0 %56
  %v59 = vsub.f32 %v28, %v32
  %v60 = vsub.f32 %v28, %v37
  %v61 = vsub.f32 %v28, %v42
  %v62 = vsub.f32 %v28, %v47
  %v63 = vsub.f32 %v28, %v52
  %v64 = vsub.f32 %v28, %v57
  %65 = vset.pattern.permute.xlu0 2
  %66 = vperm.xlu0 %65, %v17
  %v67 = vpop.permute.xlu0 %66
  %69 = vset.pattern.permute.xlu0 2
  %70 = vperm.xlu0 %69, %v18
  %v71 = vpop.permute.xlu0 %70
  %73 = vset.pattern.permute.xlu0 2
  %74 = vperm.xlu0 %73, %v19
  %v75 = vpop.permute.xlu0 %74
  %77 = vset.pattern.permute.xlu0 2
  %78 = vperm.xlu0 %77, %v20
  %v79 = vpop.permute.xlu0 %78
  %81 = vset.pattern.permute.xlu0 2
  %82 = vperm.xlu0 %81, %v21
  %v83 = vpop.permute.xlu0 %82
  %85 = vset.pattern.permute.xlu0 2
  %86 = vperm.xlu0 %85, %v22
  %v87 = vpop.permute.xlu0 %86
  %v89 = vmul.f32 %v59, %v67
  %v90 = vmul.f32 %v60, %v71
  %v91 = vmul.f32 %v61, %v75
  %v92 = vmul.f32 %v62, %v79
  %v93 = vmul.f32 %v63, %v83
  %v94 = vmul.f32 %v64, %v87
  %v95 = vlaneseq
  %v96 = vshrl.u32 %v95, 7
  %v97 = vsub.s32 0, %v96
  %v98 = vrot.slane %v24, %v97
  %99 = vset.pattern.permute.xlu0 1
  %100 = vperm.xlu0 %99, %v17
  %v101 = vpop.permute.xlu0 %100
  %103 = vset.pattern.permute.xlu0 1
  %104 = vperm.xlu0 %103, %v18
  %v105 = vpop.permute.xlu0 %104
  %107 = vset.pattern.permute.xlu0 1
  %108 = vperm.xlu0 %107, %v19
  %v109 = vpop.permute.xlu0 %108
  %111 = vset.pattern.permute.xlu0 1
  %112 = vperm.xlu0 %111, %v20
  %v113 = vpop.permute.xlu0 %112
  %115 = vset.pattern.permute.xlu0 1
  %116 = vperm.xlu0 %115, %v21
  %v117 = vpop.permute.xlu0 %116
  %119 = vset.pattern.permute.xlu0 1
  %120 = vperm.xlu0 %119, %v22
  %v121 = vpop.permute.xlu0 %120
  %v123 = vsub.f32 %v98, %v101
  %v124 = vsub.f32 %v98, %v105
  %v125 = vsub.f32 %v98, %v109
  %v126 = vsub.f32 %v98, %v113
  %v127 = vsub.f32 %v98, %v117
  %v128 = vsub.f32 %v98, %v121
  %129 = vset.pattern.permute.xlu0 3
  %130 = vperm.xlu0 %129, %v17
  %v131 = vpop.permute.xlu0 %130
  %133 = vset.pattern.permute.xlu0 3
  %134 = vperm.xlu0 %133, %v18
  %v135 = vpop.permute.xlu0 %134
  %137 = vset.pattern.permute.xlu0 3
  %138 = vperm.xlu0 %137, %v19
  %v139 = vpop.permute.xlu0 %138
  %141 = vset.pattern.permute.xlu0 3
  %142 = vperm.xlu0 %141, %v20
  %v143 = vpop.permute.xlu0 %142
  %145 = vset.pattern.permute.xlu0 3
  %146 = vperm.xlu0 %145, %v21
  %v147 = vpop.permute.xlu0 %146
  %149 = vset.pattern.permute.xlu0 3
  %150 = vperm.xlu0 %149, %v22
  %v151 = vpop.permute.xlu0 %150
  %v153 = vmul.f32 %v123, %v131
  %v154 = vmul.f32 %v124, %v135
  %v155 = vmul.f32 %v125, %v139
  %v156 = vmul.f32 %v126, %v143
  %v157 = vmul.f32 %v127, %v147
  %v158 = vmul.f32 %v128, %v151
  %v159 = vmul.f32 %v89, %v89
  %v160 = vmul.f32 %v90, %v90
  %v161 = vmul.f32 %v91, %v91
  %v162 = vmul.f32 %v92, %v92
  %v163 = vmul.f32 %v93, %v93
  %v164 = vmul.f32 %v94, %v94
  %v165 = vmul.f32 %v153, %v153
  %v166 = vmul.f32 %v154, %v154
  %v167 = vmul.f32 %v155, %v155
  %v168 = vmul.f32 %v156, %v156
  %v169 = vmul.f32 %v157, %v157
  %v170 = vmul.f32 %v158, %v158
  %v171 = vadd.f32 %v159, %v165
  %v172 = vadd.f32 %v160, %v166
  %v173 = vadd.f32 %v161, %v167
  %v174 = vadd.f32 %v162, %v168
  %v175 = vadd.f32 %v163, %v169
  %v176 = vadd.f32 %v164, %v170
  %v177 = vmul.f32 %v171, -0.5
  %v178 = vmul.f32 %v172, -0.5
  %v179 = vmul.f32 %v173, -0.5
  %v180 = vmul.f32 %v174, -0.5
  %v181 = vmul.f32 %v175, -0.5
  %v182 = vmul.f32 %v176, -0.5
  %v183 = vmul.f32 %v177, 1.442695
  %v184 = vpow.pop %v183
  %v185 = vmul.f32 %v178, 1.442695
  %v186 = vpow.pop %v185
  %v187 = vmul.f32 %v179, 1.442695
  %v188 = vpow.pop %v187
  %v189 = vmul.f32 %v180, 1.442695
  %v190 = vpow.pop %v189
  %v191 = vmul.f32 %v181, 1.442695
  %v192 = vpow.pop %v191
  %v193 = vmul.f32 %v182, 1.442695
  %v194 = vpow.pop %v193
  %195 = vset.pattern.permute.xlu0 4
  %196 = vperm.xlu0 %195, %v17
  %v197 = vpop.permute.xlu0 %196
  %199 = vset.pattern.permute.xlu0 4
  %200 = vperm.xlu0 %199, %v18
  %v201 = vpop.permute.xlu0 %200
  %203 = vset.pattern.permute.xlu0 4
  %204 = vperm.xlu0 %203, %v19
  %v205 = vpop.permute.xlu0 %204
  %207 = vset.pattern.permute.xlu0 4
  %208 = vperm.xlu0 %207, %v20
  %v209 = vpop.permute.xlu0 %208
  %211 = vset.pattern.permute.xlu0 4
  %212 = vperm.xlu0 %211, %v21
  %v213 = vpop.permute.xlu0 %212
  %215 = vset.pattern.permute.xlu0 4
  %216 = vperm.xlu0 %215, %v22
  %v217 = vpop.permute.xlu0 %216
  %v219 = vmul.f32 %v184, %v197
  %v220 = vmul.f32 %v186, %v201
  %v221 = vmul.f32 %v188, %v205
  %v222 = vmul.f32 %v190, %v209
  %v223 = vmul.f32 %v192, %v213
  %v224 = vmul.f32 %v194, %v217
  %225 = vst [vmem:[%s3] sm:$0xff] %v219
  %226 = vst [vmem:[%s3 + $0x8] sm:$0xff] %v220
  %227 = vst [vmem:[%s3 + $0x10] sm:$0xff] %v221
  %228 = vst [vmem:[%s3 + $0x18] sm:$0xff] %v222
  %229 = vst [vmem:[%s3 + $0x20] sm:$0xff] %v223
  %230 = vst [vmem:[%s3 + $0x28] sm:$0xff] %v224
  %v231 = vpack.c.bf16 %v220, %v219
  %v232 = vpack.c.bf16 %v221, %v221
  %v233 = vpack.c.bf16 %v223, %v222
  %v234 = vpack.c.bf16 %v224, %v224
  %v235 = vld [vmem:[%s2] sm:$0xf]
  %v236 = vld [vmem:[%s2 + $0x4] sm:$0xf]
  %v237 = vld [vmem:[%s2 + $0x8] sm:$0xf]
  %v238 = vld [vmem:[%s2 + $0xc] sm:$0xf]
  %v239 = vld [vmem:[%s2 + $0x10] sm:$0xf]
  %v240 = vld [vmem:[%s2 + $0x14] sm:$0xf]
  %v241 = vld [vmem:[%s2 + $0x18] sm:$0xf]
  %v242 = vld [vmem:[%s2 + $0x1c] sm:$0xf]
  %v247 = vunpack.c.l.b16 %v235
  %v248 = vunpack.c.l.b16 %v236
  %v249 = vunpack.c.l.b16 %v237
  %v250 = vunpack.c.l.b16 %v238
  %v251 = vpack.c.b16 %v248, %v247
  %v252 = vpack.c.b16 %v250, %v249
  %255 = vmatprep.subr.bf16.mxu0 0
  %256 = vmatpush1.bf16.xpose.msra.mxu0 %v251
  %257 = vmatprep.subr.bf16.mxu0 0
  %258 = vmatpush1.bf16.xpose.msra.mxu0 %v252
  %259 = vmatprep.subr.bf16.mxu0 0
  %260 = vmatpush1.bf16.xpose.msra.mxu0 0
  %261 = vmatprep.subr.bf16.mxu0 0
  %262 = vmatpush1.bf16.xpose.msra.mxu0 0
  %263 = vmatprep.subr.bf16.mxu0 0
  %264 = vmatpush1.bf16.xpose.msra.mxu0 0
  %265 = vmatprep.subr.bf16.mxu0 0
  %266 = vmatpush1.bf16.xpose.msra.mxu0 0
  %267 = vmatprep.subr.bf16.mxu0 0
  %268 = vmatpush1.bf16.xpose.msra.mxu0 0
  %269 = vmatprep.subr.bf16.mxu0 0
  %270 = vmatpush1.bf16.xpose.msra.mxu0 0
  %271 = vmatprep.subr.bf16.mxu0 0
  %272 = vmatpush1.bf16.xpose.msra.mxu0 0
  %273 = vmatprep.subr.bf16.mxu0 0
  %274 = vmatpush1.bf16.xpose.msra.mxu0 0
  %275 = vmatprep.subr.bf16.mxu0 0
  %276 = vmatpush1.bf16.xpose.msra.mxu0 0
  %277 = vmatprep.subr.bf16.mxu0 0
  %278 = vmatpush1.bf16.xpose.msra.mxu0 0
  %279 = vmatprep.subr.bf16.mxu0 0
  %280 = vmatpush1.bf16.xpose.msra.mxu0 0
  %281 = vmatprep.subr.bf16.mxu0 0
  %282 = vmatpush1.bf16.xpose.msra.mxu0 0
  %283 = vmatprep.subr.bf16.mxu0 0
  %284 = vmatpush1.bf16.xpose.msra.mxu0 0
  %285 = vmatprep.subr.bf16.mxu0 0
  %286 = vmatpush1.bf16.xpose.msra.mxu0 0
  %287 = vmatprep.mubr.bf16.mxu0 0
  %288 = vmatmul.mubr.bf16.gmra.mrb[0].mxu0 %v231
  %v289 = vpop.f32.mrb[0].mxu0
  %v290 = vadd.f32 0.0, %v289
  %v291 = vpop.f32.mrb[0].mxu0
  %v292 = vpop.f32.mrb[0].mxu0
  %v293 = vadd.f32 0.0, %v292
  %v294 = vpop.f32.mrb[0].mxu0
  %295 = vmatprep.mubr.bf16.mxu0 0
  %296 = vmatmul.mubr.bf16.gmra.mrb[0].mxu0 %v232
  %v297 = vpop.f32.mrb[0].mxu0
  %v298 = vadd.f32 0.0, %v297
  %v299 = vpop.f32.mrb[0].mxu0
  %v300 = vpop.f32.mrb[0].mxu0
  %v301 = vpop.f32.mrb[0].mxu0
  %302 = vdwg.mxu0
  %v307 = vunpack.c.l.b16 %v239
  %v308 = vunpack.c.l.b16 %v240
  %v309 = vunpack.c.l.b16 %v241
  %v310 = vunpack.c.l.b16 %v242
  %v311 = vpack.c.b16 %v308, %v307
  %v312 = vpack.c.b16 %v310, %v309
  %315 = vmatprep.subr.bf16.mxu0 0
  %316 = vmatpush1.bf16.xpose.msra.mxu0 %v311
  %317 = vmatprep.subr.bf16.mxu0 0
  %318 = vmatpush1.bf16.xpose.msra.mxu0 %v312
  %319 = vmatprep.subr.bf16.mxu0 0
  %320 = vmatpush1.bf16.xpose.msra.mxu0 0
  %321 = vmatprep.subr.bf16.mxu0 0
  %322 = vmatpush1.bf16.xpose.msra.mxu0 0
  %323 = vmatprep.subr.bf16.mxu0 0
  %324 = vmatpush1.bf16.xpose.msra.mxu0 0
  %325 = vmatprep.subr.bf16.mxu0 0
  %326 = vmatpush1.bf16.xpose.msra.mxu0 0
  %327 = vmatprep.subr.bf16.mxu0 0
  %328 = vmatpush1.bf16.xpose.msra.mxu0 0
  %329 = vmatprep.subr.bf16.mxu0 0
  %330 = vmatpush1.bf16.xpose.msra.mxu0 0
  %331 = vmatprep.subr.bf16.mxu0 0
  %332 = vmatpush1.bf16.xpose.msra.mxu0 0
  %333 = vmatprep.subr.bf16.mxu0 0
  %334 = vmatpush1.bf16.xpose.msra.mxu0 0
  %335 = vmatprep.subr.bf16.mxu0 0
  %336 = vmatpush1.bf16.xpose.msra.mxu0 0
  %337 = vmatprep.subr.bf16.mxu0 0
  %338 = vmatpush1.bf16.xpose.msra.mxu0 0
  %339 = vmatprep.subr.bf16.mxu0 0
  %340 = vmatpush1.bf16.xpose.msra.mxu0 0
  %341 = vmatprep.subr.bf16.mxu0 0
  %342 = vmatpush1.bf16.xpose.msra.mxu0 0
  %343 = vmatprep.subr.bf16.mxu0 0
  %344 = vmatpush1.bf16.xpose.msra.mxu0 0
  %345 = vmatprep.subr.bf16.mxu0 0
  %346 = vmatpush1.bf16.xpose.msra.mxu0 0
  %347 = vmatprep.mubr.bf16.mxu0 0
  %348 = vmatmul.mubr.bf16.gmra.mrb[0].mxu0 %v233
  %v349 = vpop.f32.mrb[0].mxu0
  %v350 = vadd.f32 0.0, %v349
  %v351 = vpop.f32.mrb[0].mxu0
  %v352 = vpop.f32.mrb[0].mxu0
  %v353 = vadd.f32 0.0, %v352
  %v354 = vpop.f32.mrb[0].mxu0
  %355 = vmatprep.mubr.bf16.mxu0 0
  %356 = vmatmul.mubr.bf16.gmra.mrb[0].mxu0 %v234
  %v357 = vpop.f32.mrb[0].mxu0
  %v358 = vadd.f32 0.0, %v357
  %v359 = vpop.f32.mrb[0].mxu0
  %v360 = vpop.f32.mrb[0].mxu0
  %v361 = vpop.f32.mrb[0].mxu0
  %362 = vdwg.mxu0
  %vm363 = vcmask 261120
  %364 = vst.msk [vmem:[%s4] sm:$0xff] %vm363, %v290
  %365 = vst.msk [vmem:[%s4 + $0x8] sm:$0xff] %vm363, %v293
  %366 = vst.msk [vmem:[%s4 + $0x10] sm:$0xff] %vm363, %v298
  %367 = vst.msk [vmem:[%s4 + $0x18] sm:$0xff] %vm363, %v350
  %368 = vst.msk [vmem:[%s4 + $0x20] sm:$0xff] %vm363, %v353
  %369 = vst.msk [vmem:[%s4 + $0x28] sm:$0xff] %vm363, %v358
  // Predicated region
  $region14: #{cross_attention_forward.3} parent=0 // pred_check
    _
  $region15: #{cross_attention_forward.3} parent=0 // pred_check_branch
    %371 = sbr.rel (0) target = $region17
  $region16: #{cross_attention_forward.3} parent=0 // pred_region
    _
  $region17: #{cross_attention_forward.3} parent=0 // pred_fallthru
    _
  // Predicated region
  $region18: #{cross_attention_forward.3} parent=0 // pred_check
    _
  $region19: #{cross_attention_forward.3} parent=0 // pred_check_branch
    %373 = sbr.rel (0) target = $region21
  $region20: #{cross_attention_forward.3} parent=0 // pred_region
    _
  $region21: #{cross_attention_forward.3} parent=0 // pred_fallthru
    _
  // Predicated region
  $region22: #{cross_attention_forward.3} parent=0 // pred_check
    _
  $region23: #{cross_attention_forward.3} parent=0 // pred_check_branch
    %375 = sbr.rel (0) target = $region25
  $region24: #{cross_attention_forward.3} parent=0 // pred_region
    _
  $region25: #{cross_attention_forward.3} parent=0 // pred_fallthru
    _
  // Predicated region
  $region26: #{cross_attention_forward.3} parent=0 // pred_check
    _
  $region27: #{cross_attention_forward.3} parent=0 // pred_check_branch
    %377 = sbr.rel (0) target = $region29
  $region28: #{cross_attention_forward.3} parent=0 // pred_region
    _
  $region29: #{cross_attention_forward.3} parent=0 // pred_fallthru
    _

</llo_original>
